<compile_context>
chip_gen: v7x
topology: tpu7x:2x2x1
jax: 0.10.0
libtpu: 0.0.40
codegen_flags: <defaults>
</compile_context>

<pallas_src>
import functools

import jax
import jax.numpy as jnp
from jax import lax
from jax.experimental import pallas as pl
from jax.experimental.pallas import tpu as pltpu


# ---------------------------------------------------------------------------
# Stage 1: per-head QKV projection into head-major layout (b, heads, n, d_head)
# ---------------------------------------------------------------------------
def qkv_project_kernel(x_ref, wq_ref, wk_ref, wv_ref, q_ref, k_ref, v_ref, *, heads):
    x = x_ref[0]                                             # (tq, dim)
    # heads is small & static; each iteration stores its (tq, d_head) result
    # immediately so live ranges stay bounded.
    for h in range(heads):
        q_ref[0, h] = jnp.dot(x, wq_ref[h],
                              preferred_element_type=jnp.float32).astype(q_ref.dtype)
        k_ref[0, h] = jnp.dot(x, wk_ref[h],
                              preferred_element_type=jnp.float32).astype(k_ref.dtype)
        v_ref[0, h] = jnp.dot(x, wv_ref[h],
                              preferred_element_type=jnp.float32).astype(v_ref.dtype)


# ---------------------------------------------------------------------------
# Stage 2: flash attention + fused per-head output projection + bias
# grid = (b, q_tiles, heads, kv_tiles)
# ---------------------------------------------------------------------------
def flash_attn_kernel(q_ref, k_ref, v_ref, wout_ref, bias_ref, o_ref,
                      m_sc, l_sc, acc_sc, oacc_sc):
    h = pl.program_id(2)
    ki = pl.program_id(3)
    last_h = pl.num_programs(2) - 1
    last_kv = pl.num_programs(3) - 1

    # Output-projection accumulator: zero once per (batch, q_tile).
    @pl.when(jnp.logical_and(h == 0, ki == 0))
    def _():
        oacc_sc[...] = jnp.zeros_like(oacc_sc)

    # Flash state: zero at the start of every head's KV sweep.
    @pl.when(ki == 0)
    def _():
        m_sc[...] = jnp.full_like(m_sc, -jnp.inf)
        l_sc[...] = jnp.zeros_like(l_sc)
        acc_sc[...] = jnp.zeros_like(acc_sc)

    q = q_ref[0, 0]                                          # (tq, d_head), scale folded in
    k = k_ref[0, 0]                                          # (tk, d_head)
    v = v_ref[0, 0]                                          # (tk, d_head)

    # Contract the head dim of both operands directly (no explicit k.T).
    s = lax.dot_general(q, k, (((1,), (1,)), ((), ())),
                        preferred_element_type=jnp.float32)  # (tq, tk)

    m_prev = m_sc[...]
    m_new = jnp.maximum(m_prev, jnp.max(s, axis=-1, keepdims=True))
    alpha = jnp.exp(m_prev - m_new)
    p = jnp.exp(s - m_new)
    l_sc[...] = alpha * l_sc[...] + jnp.sum(p, axis=-1, keepdims=True)
    acc_sc[...] = alpha * acc_sc[...] + jnp.dot(
        p.astype(v.dtype), v, preferred_element_type=jnp.float32)
    m_sc[...] = m_new

    # Per-head finalize: normalize and fold straight into the output projection
    # (no concatenation of head outputs).
    @pl.when(ki == last_kv)
    def _():
        head_out = acc_sc[...] * pl.reciprocal(l_sc[...], approx=True)   # (tq, d_head)
        oacc_sc[...] += jnp.dot(head_out.astype(wout_ref.dtype), wout_ref[0],
                                preferred_element_type=jnp.float32)

    @pl.when(jnp.logical_and(h == last_h, ki == last_kv))
    def _():
        o_ref[0] = (oacc_sc[...] + bias_ref[...]).astype(o_ref.dtype)


def _pick_tile(n, target):
    """Largest tile <= target that divides n; full extent when n <= target."""
    if n <= target:
        return n
    t = target
    while t > 0 and n % t != 0:
        t -= 8
    return t if t > 0 else n


def attention_forward(x, w_qkv, w_out, b_out, *, heads, q_tile=256, kv_tile=512):
    """x: (b, n, dim); w_qkv: (3*dim, dim) torch-style; w_out: (dim, dim); b_out: (dim,)."""
    b, n, dim = x.shape
    assert dim % heads == 0, "dim must be divisible by heads"
    d_head = dim // heads
    scale = float(dim) ** -0.5          # module uses dim**-0.5 (not d_head**-0.5)
    dt = x.dtype

    # Per-head projection weights: (heads, dim, d_head) so each matmul is
    # (rows, dim) @ (dim, d_head). Softmax scale folded into the Q weights.
    def per_head(w):
        return jnp.transpose(w.reshape(heads, d_head, dim), (0, 2, 1))

    wq = (per_head(w_qkv[0 * dim:1 * dim]) * scale).astype(dt)
    wk = per_head(w_qkv[1 * dim:2 * dim]).astype(dt)
    wv = per_head(w_qkv[2 * dim:3 * dim]).astype(dt)
    # Output projection per head: (heads, d_head, dim) so out = sum_h head_out_h @ wo[h].
    wo = jnp.transpose(w_out).reshape(heads, d_head, dim).astype(dt)
    bias = b_out.reshape(1, dim).astype(jnp.float32)

    tq = _pick_tile(n, q_tile)
    tk = _pick_tile(n, kv_tile)
    nq, nk = n // tq, n // tk

    # TODO(synk): for peak MXU on v6e/v7x, cast wq/wk/wv/wo and the q/k/v
    # intermediates to bfloat16 (f32 accumulation kept) when accuracy allows.

    # ---- Stage 1: QKV projection into head-major (b, heads, n, d_head). ----
    qkv_shape = jax.ShapeDtypeStruct((b, heads, n, d_head), dt)
    q, k, v = pl.pallas_call(
        functools.partial(qkv_project_kernel, heads=heads),
        out_shape=(qkv_shape, qkv_shape, qkv_shape),
        grid_spec=pltpu.PrefetchScalarGridSpec(
            num_scalar_prefetch=0,
            grid=(b, nq),
            in_specs=[
                pl.BlockSpec((1, tq, dim), lambda bi, qi: (bi, qi, 0)),
                pl.BlockSpec((heads, dim, d_head), lambda bi, qi: (0, 0, 0)),
                pl.BlockSpec((heads, dim, d_head), lambda bi, qi: (0, 0, 0)),
                pl.BlockSpec((heads, dim, d_head), lambda bi, qi: (0, 0, 0)),
            ],
            out_specs=(
                pl.BlockSpec((1, heads, tq, d_head), lambda bi, qi: (bi, 0, qi, 0)),
                pl.BlockSpec((1, heads, tq, d_head), lambda bi, qi: (bi, 0, qi, 0)),
                pl.BlockSpec((1, heads, tq, d_head), lambda bi, qi: (bi, 0, qi, 0)),
            ),
        ),
        compiler_params=pltpu.CompilerParams(
            dimension_semantics=("parallel", "parallel"),
            vmem_limit_bytes=32 * 1024 * 1024),
    )(x, wq, wk, wv)

    # ---- Stage 2: flash attention + fused per-head output projection. ----
    out = pl.pallas_call(
        flash_attn_kernel,
        out_shape=jax.ShapeDtypeStruct((b, n, dim), dt),
        grid_spec=pltpu.PrefetchScalarGridSpec(
            num_scalar_prefetch=0,
            grid=(b, nq, heads, nk),
            in_specs=[
                pl.BlockSpec((1, 1, tq, d_head), lambda bi, qi, h, ki: (bi, h, qi, 0)),
                pl.BlockSpec((1, 1, tk, d_head), lambda bi, qi, h, ki: (bi, h, ki, 0)),
                pl.BlockSpec((1, 1, tk, d_head), lambda bi, qi, h, ki: (bi, h, ki, 0)),
                pl.BlockSpec((1, d_head, dim), lambda bi, qi, h, ki: (h, 0, 0)),
                pl.BlockSpec((1, dim), lambda bi, qi, h, ki: (0, 0)),
            ],
            out_specs=pl.BlockSpec((1, tq, dim), lambda bi, qi, h, ki: (bi, qi, 0)),
            scratch_shapes=[
                pltpu.VMEM((tq, 1), jnp.float32),        # running max m
                pltpu.VMEM((tq, 1), jnp.float32),        # running denom l
                pltpu.VMEM((tq, d_head), jnp.float32),   # per-head unnormalized acc
                pltpu.VMEM((tq, dim), jnp.float32),      # output-projection accumulator
            ],
        ),
        compiler_params=pltpu.CompilerParams(
            dimension_semantics=("parallel", "parallel", "arbitrary", "arbitrary"),
            vmem_limit_bytes=32 * 1024 * 1024),
    )(q, k, v, wo, bias)
    return out


def attention_reference(x, w_qkv, w_out, b_out, *, heads):
    b, n, dim = x.shape
    d_head = dim // heads
    scale = float(dim) ** -0.5
    qkv = jnp.einsum("bnd,ed->bne", x, w_qkv)
    q, k, v = jnp.split(qkv, 3, axis=-1)

    def to_heads(t):
        return jnp.transpose(t.reshape(b, n, heads, d_head), (0, 2, 1, 3))

    q, k, v = map(to_heads, (q, k, v))
    dots = jnp.einsum("bhid,bhjd->bhij", q, k) * scale
    attn = jax.nn.softmax(dots, axis=-1)
    out = jnp.einsum("bhij,bhjd->bhid", attn, v)
    out = jnp.transpose(out, (0, 2, 1, 3)).reshape(b, n, dim)
    return jnp.einsum("bnd,ed->bne", out, w_out) + b_out


if __name__ == "__main__":
    batch, seq, dim, heads = 2, 8, 32, 4

    key = jax.random.PRNGKey(0)
    kx, kq, ko, kb = jax.random.split(key, 4)

    x = jax.random.normal(kx, (batch, seq, dim), dtype=jnp.float32)
    # Deterministic synthetic parameters (torch nn.Linear weight shapes).
    w_qkv = jax.random.normal(kq, (3 * dim, dim), dtype=jnp.float32) * (dim ** -0.5)
    w_out = jax.random.normal(ko, (dim, dim), dtype=jnp.float32) * (dim ** -0.5)
    b_out = jax.random.normal(kb, (dim,), dtype=jnp.float32) * 0.01

    y = attention_forward(x, w_qkv, w_out, b_out, heads=heads)
    y = jax.block_until_ready(y)

    y_ref = attention_reference(x, w_qkv, w_out, b_out, heads=heads)
    # Tolerance loosened slightly vs. pure-f32 because the softmax denominator
    # uses the EUP approximate reciprocal (pl.reciprocal(approx=True)).
    assert jnp.allclose(y, y_ref, atol=1e-2, rtol=1e-2), "mismatch vs reference"

    print("KERNEL_OK")
</pallas_src>

<mosaic_0001>
module attributes {stable_mosaic.version = 11 : i64} {
  func.func @qkv_project_kernel(%arg0: i32, %arg1: i32, %arg2: memref<1x8x32xf32, #tpu.memory_space<vmem>>, %arg3: memref<4x32x8xf32, #tpu.memory_space<vmem>>, %arg4: memref<4x32x8xf32, #tpu.memory_space<vmem>>, %arg5: memref<4x32x8xf32, #tpu.memory_space<vmem>>, %arg6: memref<1x4x8x8xf32, #tpu.memory_space<vmem>>, %arg7: memref<1x4x8x8xf32, #tpu.memory_space<vmem>>, %arg8: memref<1x4x8x8xf32, #tpu.memory_space<vmem>>) attributes {dimension_semantics = [#tpu.dimension_semantics<parallel>, #tpu.dimension_semantics<parallel>], iteration_bounds = array<i64: 2, 1>, scalar_prefetch = 0 : i64, scratch_operands = 0 : i64, tpu.core_type = #tpu.core_type<tc>, window_params = [{transform_indices = @transform_0, window_bounds = array<i64: 1, 8, 32>}, {pipeline_mode = #tpu.pipeline_mode<synchronous>, transform_indices = @transform_1, window_bounds = array<i64: 4, 32, 8>}, {pipeline_mode = #tpu.pipeline_mode<synchronous>, transform_indices = @transform_2, window_bounds = array<i64: 4, 32, 8>}, {pipeline_mode = #tpu.pipeline_mode<synchronous>, transform_indices = @transform_3, window_bounds = array<i64: 4, 32, 8>}, {transform_indices = @transform_4, window_bounds = array<i64: 1, 4, 8, 8>}, {transform_indices = @transform_5, window_bounds = array<i64: 1, 4, 8, 8>}, {transform_indices = @transform_6, window_bounds = array<i64: 1, 4, 8, 8>}]} {
    %c0 = arith.constant 0 : index
    %c0_0 = arith.constant 0 : index
    %c0_1 = arith.constant 0 : index
    %0 = vector.load %arg2[%c0, %c0_0, %c0_1] : memref<1x8x32xf32, #tpu.memory_space<vmem>>, vector<1x8x32xf32>
    %1 = vector.shape_cast %0 : vector<1x8x32xf32> to vector<8x32xf32>
    %c0_2 = arith.constant 0 : index
    %c0_3 = arith.constant 0 : index
    %c0_4 = arith.constant 0 : index
    %2 = vector.load %arg3[%c0_2, %c0_3, %c0_4] : memref<4x32x8xf32, #tpu.memory_space<vmem>>, vector<1x32x8xf32>
    %3 = vector.shape_cast %2 : vector<1x32x8xf32> to vector<32x8xf32>
    %cst = arith.constant dense<0.000000e+00> : vector<8x8xf32>
    %4 = tpu.matmul %1, %3, %cst {dimension_numbers = #tpu.dot_dimension_numbers<[1], [0], [0], [1], [0, 0, 1, 1], [], []>} : vector<8x32xf32>, vector<32x8xf32>, vector<8x8xf32> -> vector<8x8xf32>
    %c0_5 = arith.constant 0 : index
    %c0_6 = arith.constant 0 : index
    %c0_7 = arith.constant 0 : index
    %c0_8 = arith.constant 0 : index
    %5 = vector.load %arg6[%c0_5, %c0_6, %c0_7, %c0_8] : memref<1x4x8x8xf32, #tpu.memory_space<vmem>>, vector<1x1x8x8xf32>
    %6 = vector.shape_cast %5 : vector<1x1x8x8xf32> to vector<8x8xf32>
    %7 = vector.shape_cast %4 : vector<8x8xf32> to vector<1x1x8x8xf32>
    tpu.vector_store %arg6[%c0_5, %c0_6, %c0_7, %c0_8], %7 {strides = array<i32>} : memref<1x4x8x8xf32, #tpu.memory_space<vmem>>, vector<1x1x8x8xf32>,
    %c0_9 = arith.constant 0 : index
    %c0_10 = arith.constant 0 : index
    %c0_11 = arith.constant 0 : index
    %8 = vector.load %arg4[%c0_9, %c0_10, %c0_11] : memref<4x32x8xf32, #tpu.memory_space<vmem>>, vector<1x32x8xf32>
    %9 = vector.shape_cast %8 : vector<1x32x8xf32> to vector<32x8xf32>
    %cst_12 = arith.constant dense<0.000000e+00> : vector<8x8xf32>
    %10 = tpu.matmul %1, %9, %cst_12 {dimension_numbers = #tpu.dot_dimension_numbers<[1], [0], [0], [1], [0, 0, 1, 1], [], []>} : vector<8x32xf32>, vector<32x8xf32>, vector<8x8xf32> -> vector<8x8xf32>
    %c0_13 = arith.constant 0 : index
    %c0_14 = arith.constant 0 : index
    %c0_15 = arith.constant 0 : index
    %c0_16 = arith.constant 0 : index
    %11 = vector.load %arg7[%c0_13, %c0_14, %c0_15, %c0_16] : memref<1x4x8x8xf32, #tpu.memory_space<vmem>>, vector<1x1x8x8xf32>
    %12 = vector.shape_cast %11 : vector<1x1x8x8xf32> to vector<8x8xf32>
    %13 = vector.shape_cast %10 : vector<8x8xf32> to vector<1x1x8x8xf32>
    tpu.vector_store %arg7[%c0_13, %c0_14, %c0_15, %c0_16], %13 {strides = array<i32>} : memref<1x4x8x8xf32, #tpu.memory_space<vmem>>, vector<1x1x8x8xf32>,
    %c0_17 = arith.constant 0 : index
    %c0_18 = arith.constant 0 : index
    %c0_19 = arith.constant 0 : index
    %14 = vector.load %arg5[%c0_17, %c0_18, %c0_19] : memref<4x32x8xf32, #tpu.memory_space<vmem>>, vector<1x32x8xf32>
    %15 = vector.shape_cast %14 : vector<1x32x8xf32> to vector<32x8xf32>
    %cst_20 = arith.constant dense<0.000000e+00> : vector<8x8xf32>
    %16 = tpu.matmul %1, %15, %cst_20 {dimension_numbers = #tpu.dot_dimension_numbers<[1], [0], [0], [1], [0, 0, 1, 1], [], []>} : vector<8x32xf32>, vector<32x8xf32>, vector<8x8xf32> -> vector<8x8xf32>
    %c0_21 = arith.constant 0 : index
    %c0_22 = arith.constant 0 : index
    %c0_23 = arith.constant 0 : index
    %c0_24 = arith.constant 0 : index
    %17 = vector.load %arg8[%c0_21, %c0_22, %c0_23, %c0_24] : memref<1x4x8x8xf32, #tpu.memory_space<vmem>>, vector<1x1x8x8xf32>
    %18 = vector.shape_cast %17 : vector<1x1x8x8xf32> to vector<8x8xf32>
    %19 = vector.shape_cast %16 : vector<8x8xf32> to vector<1x1x8x8xf32>
    tpu.vector_store %arg8[%c0_21, %c0_22, %c0_23, %c0_24], %19 {strides = array<i32>} : memref<1x4x8x8xf32, #tpu.memory_space<vmem>>, vector<1x1x8x8xf32>,
    %c1 = arith.constant 1 : index
    %c0_25 = arith.constant 0 : index
    %c0_26 = arith.constant 0 : index
    %20 = vector.load %arg3[%c1, %c0_25, %c0_26] : memref<4x32x8xf32, #tpu.memory_space<vmem>>, vector<1x32x8xf32>
    %21 = vector.shape_cast %20 : vector<1x32x8xf32> to vector<32x8xf32>
    %cst_27 = arith.constant dense<0.000000e+00> : vector<8x8xf32>
    %22 = tpu.matmul %1, %21, %cst_27 {dimension_numbers = #tpu.dot_dimension_numbers<[1], [0], [0], [1], [0, 0, 1, 1], [], []>} : vector<8x32xf32>, vector<32x8xf32>, vector<8x8xf32> -> vector<8x8xf32>
    %c0_28 = arith.constant 0 : index
    %c1_29 = arith.constant 1 : index
    %c0_30 = arith.constant 0 : index
    %c0_31 = arith.constant 0 : index
    %23 = vector.load %arg6[%c0_28, %c1_29, %c0_30, %c0_31] : memref<1x4x8x8xf32, #tpu.memory_space<vmem>>, vector<1x1x8x8xf32>
    %24 = vector.shape_cast %23 : vector<1x1x8x8xf32> to vector<8x8xf32>
    %25 = vector.shape_cast %22 : vector<8x8xf32> to vector<1x1x8x8xf32>
    tpu.vector_store %arg6[%c0_28, %c1_29, %c0_30, %c0_31], %25 {strides = array<i32>} : memref<1x4x8x8xf32, #tpu.memory_space<vmem>>, vector<1x1x8x8xf32>,
    %c1_32 = arith.constant 1 : index
    %c0_33 = arith.constant 0 : index
    %c0_34 = arith.constant 0 : index
    %26 = vector.load %arg4[%c1_32, %c0_33, %c0_34] : memref<4x32x8xf32, #tpu.memory_space<vmem>>, vector<1x32x8xf32>
    %27 = vector.shape_cast %26 : vector<1x32x8xf32> to vector<32x8xf32>
    %cst_35 = arith.constant dense<0.000000e+00> : vector<8x8xf32>
    %28 = tpu.matmul %1, %27, %cst_35 {dimension_numbers = #tpu.dot_dimension_numbers<[1], [0], [0], [1], [0, 0, 1, 1], [], []>} : vector<8x32xf32>, vector<32x8xf32>, vector<8x8xf32> -> vector<8x8xf32>
    %c0_36 = arith.constant 0 : index
    %c1_37 = arith.constant 1 : index
    %c0_38 = arith.constant 0 : index
    %c0_39 = arith.constant 0 : index
    %29 = vector.load %arg7[%c0_36, %c1_37, %c0_38, %c0_39] : memref<1x4x8x8xf32, #tpu.memory_space<vmem>>, vector<1x1x8x8xf32>
    %30 = vector.shape_cast %29 : vector<1x1x8x8xf32> to vector<8x8xf32>
    %31 = vector.shape_cast %28 : vector<8x8xf32> to vector<1x1x8x8xf32>
    tpu.vector_store %arg7[%c0_36, %c1_37, %c0_38, %c0_39], %31 {strides = array<i32>} : memref<1x4x8x8xf32, #tpu.memory_space<vmem>>, vector<1x1x8x8xf32>,
    %c1_40 = arith.constant 1 : index
    %c0_41 = arith.constant 0 : index
    %c0_42 = arith.constant 0 : index
    %32 = vector.load %arg5[%c1_40, %c0_41, %c0_42] : memref<4x32x8xf32, #tpu.memory_space<vmem>>, vector<1x32x8xf32>
    %33 = vector.shape_cast %32 : vector<1x32x8xf32> to vector<32x8xf32>
    %cst_43 = arith.constant dense<0.000000e+00> : vector<8x8xf32>
    %34 = tpu.matmul %1, %33, %cst_43 {dimension_numbers = #tpu.dot_dimension_numbers<[1], [0], [0], [1], [0, 0, 1, 1], [], []>} : vector<8x32xf32>, vector<32x8xf32>, vector<8x8xf32> -> vector<8x8xf32>
    %c0_44 = arith.constant 0 : index
    %c1_45 = arith.constant 1 : index
    %c0_46 = arith.constant 0 : index
    %c0_47 = arith.constant 0 : index
    %35 = vector.load %arg8[%c0_44, %c1_45, %c0_46, %c0_47] : memref<1x4x8x8xf32, #tpu.memory_space<vmem>>, vector<1x1x8x8xf32>
    %36 = vector.shape_cast %35 : vector<1x1x8x8xf32> to vector<8x8xf32>
    %37 = vector.shape_cast %34 : vector<8x8xf32> to vector<1x1x8x8xf32>
    tpu.vector_store %arg8[%c0_44, %c1_45, %c0_46, %c0_47], %37 {strides = array<i32>} : memref<1x4x8x8xf32, #tpu.memory_space<vmem>>, vector<1x1x8x8xf32>,
    %c2 = arith.constant 2 : index
    %c0_48 = arith.constant 0 : index
    %c0_49 = arith.constant 0 : index
    %38 = vector.load %arg3[%c2, %c0_48, %c0_49] : memref<4x32x8xf32, #tpu.memory_space<vmem>>, vector<1x32x8xf32>
    %39 = vector.shape_cast %38 : vector<1x32x8xf32> to vector<32x8xf32>
    %cst_50 = arith.constant dense<0.000000e+00> : vector<8x8xf32>
    %40 = tpu.matmul %1, %39, %cst_50 {dimension_numbers = #tpu.dot_dimension_numbers<[1], [0], [0], [1], [0, 0, 1, 1], [], []>} : vector<8x32xf32>, vector<32x8xf32>, vector<8x8xf32> -> vector<8x8xf32>
    %c0_51 = arith.constant 0 : index
    %c2_52 = arith.constant 2 : index
    %c0_53 = arith.constant 0 : index
    %c0_54 = arith.constant 0 : index
    %41 = vector.load %arg6[%c0_51, %c2_52, %c0_53, %c0_54] : memref<1x4x8x8xf32, #tpu.memory_space<vmem>>, vector<1x1x8x8xf32>
    %42 = vector.shape_cast %41 : vector<1x1x8x8xf32> to vector<8x8xf32>
    %43 = vector.shape_cast %40 : vector<8x8xf32> to vector<1x1x8x8xf32>
    tpu.vector_store %arg6[%c0_51, %c2_52, %c0_53, %c0_54], %43 {strides = array<i32>} : memref<1x4x8x8xf32, #tpu.memory_space<vmem>>, vector<1x1x8x8xf32>,
    %c2_55 = arith.constant 2 : index
    %c0_56 = arith.constant 0 : index
    %c0_57 = arith.constant 0 : index
    %44 = vector.load %arg4[%c2_55, %c0_56, %c0_57] : memref<4x32x8xf32, #tpu.memory_space<vmem>>, vector<1x32x8xf32>
    %45 = vector.shape_cast %44 : vector<1x32x8xf32> to vector<32x8xf32>
    %cst_58 = arith.constant dense<0.000000e+00> : vector<8x8xf32>
    %46 = tpu.matmul %1, %45, %cst_58 {dimension_numbers = #tpu.dot_dimension_numbers<[1], [0], [0], [1], [0, 0, 1, 1], [], []>} : vector<8x32xf32>, vector<32x8xf32>, vector<8x8xf32> -> vector<8x8xf32>
    %c0_59 = arith.constant 0 : index
    %c2_60 = arith.constant 2 : index
    %c0_61 = arith.constant 0 : index
    %c0_62 = arith.constant 0 : index
    %47 = vector.load %arg7[%c0_59, %c2_60, %c0_61, %c0_62] : memref<1x4x8x8xf32, #tpu.memory_space<vmem>>, vector<1x1x8x8xf32>
    %48 = vector.shape_cast %47 : vector<1x1x8x8xf32> to vector<8x8xf32>
    %49 = vector.shape_cast %46 : vector<8x8xf32> to vector<1x1x8x8xf32>
    tpu.vector_store %arg7[%c0_59, %c2_60, %c0_61, %c0_62], %49 {strides = array<i32>} : memref<1x4x8x8xf32, #tpu.memory_space<vmem>>, vector<1x1x8x8xf32>,
    %c2_63 = arith.constant 2 : index
    %c0_64 = arith.constant 0 : index
    %c0_65 = arith.constant 0 : index
    %50 = vector.load %arg5[%c2_63, %c0_64, %c0_65] : memref<4x32x8xf32, #tpu.memory_space<vmem>>, vector<1x32x8xf32>
    %51 = vector.shape_cast %50 : vector<1x32x8xf32> to vector<32x8xf32>
    %cst_66 = arith.constant dense<0.000000e+00> : vector<8x8xf32>
    %52 = tpu.matmul %1, %51, %cst_66 {dimension_numbers = #tpu.dot_dimension_numbers<[1], [0], [0], [1], [0, 0, 1, 1], [], []>} : vector<8x32xf32>, vector<32x8xf32>, vector<8x8xf32> -> vector<8x8xf32>
    %c0_67 = arith.constant 0 : index
    %c2_68 = arith.constant 2 : index
    %c0_69 = arith.constant 0 : index
    %c0_70 = arith.constant 0 : index
    %53 = vector.load %arg8[%c0_67, %c2_68, %c0_69, %c0_70] : memref<1x4x8x8xf32, #tpu.memory_space<vmem>>, vector<1x1x8x8xf32>
    %54 = vector.shape_cast %53 : vector<1x1x8x8xf32> to vector<8x8xf32>
    %55 = vector.shape_cast %52 : vector<8x8xf32> to vector<1x1x8x8xf32>
    tpu.vector_store %arg8[%c0_67, %c2_68, %c0_69, %c0_70], %55 {strides = array<i32>} : memref<1x4x8x8xf32, #tpu.memory_space<vmem>>, vector<1x1x8x8xf32>,
    %c3 = arith.constant 3 : index
    %c0_71 = arith.constant 0 : index
    %c0_72 = arith.constant 0 : index
    %56 = vector.load %arg3[%c3, %c0_71, %c0_72] : memref<4x32x8xf32, #tpu.memory_space<vmem>>, vector<1x32x8xf32>
    %57 = vector.shape_cast %56 : vector<1x32x8xf32> to vector<32x8xf32>
    %cst_73 = arith.constant dense<0.000000e+00> : vector<8x8xf32>
    %58 = tpu.matmul %1, %57, %cst_73 {dimension_numbers = #tpu.dot_dimension_numbers<[1], [0], [0], [1], [0, 0, 1, 1], [], []>} : vector<8x32xf32>, vector<32x8xf32>, vector<8x8xf32> -> vector<8x8xf32>
    %c0_74 = arith.constant 0 : index
    %c3_75 = arith.constant 3 : index
    %c0_76 = arith.constant 0 : index
    %c0_77 = arith.constant 0 : index
    %59 = vector.load %arg6[%c0_74, %c3_75, %c0_76, %c0_77] : memref<1x4x8x8xf32, #tpu.memory_space<vmem>>, vector<1x1x8x8xf32>
    %60 = vector.shape_cast %59 : vector<1x1x8x8xf32> to vector<8x8xf32>
    %61 = vector.shape_cast %58 : vector<8x8xf32> to vector<1x1x8x8xf32>
    tpu.vector_store %arg6[%c0_74, %c3_75, %c0_76, %c0_77], %61 {strides = array<i32>} : memref<1x4x8x8xf32, #tpu.memory_space<vmem>>, vector<1x1x8x8xf32>,
    %c3_78 = arith.constant 3 : index
    %c0_79 = arith.constant 0 : index
    %c0_80 = arith.constant 0 : index
    %62 = vector.load %arg4[%c3_78, %c0_79, %c0_80] : memref<4x32x8xf32, #tpu.memory_space<vmem>>, vector<1x32x8xf32>
    %63 = vector.shape_cast %62 : vector<1x32x8xf32> to vector<32x8xf32>
    %cst_81 = arith.constant dense<0.000000e+00> : vector<8x8xf32>
    %64 = tpu.matmul %1, %63, %cst_81 {dimension_numbers = #tpu.dot_dimension_numbers<[1], [0], [0], [1], [0, 0, 1, 1], [], []>} : vector<8x32xf32>, vector<32x8xf32>, vector<8x8xf32> -> vector<8x8xf32>
    %c0_82 = arith.constant 0 : index
    %c3_83 = arith.constant 3 : index
    %c0_84 = arith.constant 0 : index
    %c0_85 = arith.constant 0 : index
    %65 = vector.load %arg7[%c0_82, %c3_83, %c0_84, %c0_85] : memref<1x4x8x8xf32, #tpu.memory_space<vmem>>, vector<1x1x8x8xf32>
    %66 = vector.shape_cast %65 : vector<1x1x8x8xf32> to vector<8x8xf32>
    %67 = vector.shape_cast %64 : vector<8x8xf32> to vector<1x1x8x8xf32>
    tpu.vector_store %arg7[%c0_82, %c3_83, %c0_84, %c0_85], %67 {strides = array<i32>} : memref<1x4x8x8xf32, #tpu.memory_space<vmem>>, vector<1x1x8x8xf32>,
    %c3_86 = arith.constant 3 : index
    %c0_87 = arith.constant 0 : index
    %c0_88 = arith.constant 0 : index
    %68 = vector.load %arg5[%c3_86, %c0_87, %c0_88] : memref<4x32x8xf32, #tpu.memory_space<vmem>>, vector<1x32x8xf32>
    %69 = vector.shape_cast %68 : vector<1x32x8xf32> to vector<32x8xf32>
    %cst_89 = arith.constant dense<0.000000e+00> : vector<8x8xf32>
    %70 = tpu.matmul %1, %69, %cst_89 {dimension_numbers = #tpu.dot_dimension_numbers<[1], [0], [0], [1], [0, 0, 1, 1], [], []>} : vector<8x32xf32>, vector<32x8xf32>, vector<8x8xf32> -> vector<8x8xf32>
    %c0_90 = arith.constant 0 : index
    %c3_91 = arith.constant 3 : index
    %c0_92 = arith.constant 0 : index
    %c0_93 = arith.constant 0 : index
    %71 = vector.load %arg8[%c0_90, %c3_91, %c0_92, %c0_93] : memref<1x4x8x8xf32, #tpu.memory_space<vmem>>, vector<1x1x8x8xf32>
    %72 = vector.shape_cast %71 : vector<1x1x8x8xf32> to vector<8x8xf32>
    %73 = vector.shape_cast %70 : vector<8x8xf32> to vector<1x1x8x8xf32>
    tpu.vector_store %arg8[%c0_90, %c3_91, %c0_92, %c0_93], %73 {strides = array<i32>} : memref<1x4x8x8xf32, #tpu.memory_space<vmem>>, vector<1x1x8x8xf32>,
    return
  }
  func.func @transform_0(%arg0: i32, %arg1: i32) -> (i32, i32, i32) {
    %c0_i32 = arith.constant 0 : i32
    %c0_i32_0 = arith.constant 0 : i32
    return %arg0, %arg1, %c0_i32 : i32, i32, i32
  }
  func.func @transform_1(%arg0: i32, %arg1: i32) -> (i32, i32, i32) {
    %c0_i32 = arith.constant 0 : i32
    %c0_i32_0 = arith.constant 0 : i32
    %c0_i32_1 = arith.constant 0 : i32
    %c0_i32_2 = arith.constant 0 : i32
    return %c0_i32, %c0_i32_0, %c0_i32_1 : i32, i32, i32
  }
  func.func @transform_2(%arg0: i32, %arg1: i32) -> (i32, i32, i32) {
    %c0_i32 = arith.constant 0 : i32
    %c0_i32_0 = arith.constant 0 : i32
    %c0_i32_1 = arith.constant 0 : i32
    %c0_i32_2 = arith.constant 0 : i32
    return %c0_i32, %c0_i32_0, %c0_i32_1 : i32, i32, i32
  }
  func.func @transform_3(%arg0: i32, %arg1: i32) -> (i32, i32, i32) {
    %c0_i32 = arith.constant 0 : i32
    %c0_i32_0 = arith.constant 0 : i32
    %c0_i32_1 = arith.constant 0 : i32
    %c0_i32_2 = arith.constant 0 : i32
    return %c0_i32, %c0_i32_0, %c0_i32_1 : i32, i32, i32
  }
  func.func @transform_4(%arg0: i32, %arg1: i32) -> (i32, i32, i32, i32) {
    %c0_i32 = arith.constant 0 : i32
    %c0_i32_0 = arith.constant 0 : i32
    %c0_i32_1 = arith.constant 0 : i32
    return %arg0, %c0_i32, %arg1, %c0_i32_0 : i32, i32, i32, i32
  }
  func.func @transform_5(%arg0: i32, %arg1: i32) -> (i32, i32, i32, i32) {
    %c0_i32 = arith.constant 0 : i32
    %c0_i32_0 = arith.constant 0 : i32
    %c0_i32_1 = arith.constant 0 : i32
    return %arg0, %c0_i32, %arg1, %c0_i32_0 : i32, i32, i32, i32
  }
  func.func @transform_6(%arg0: i32, %arg1: i32) -> (i32, i32, i32, i32) {
    %c0_i32 = arith.constant 0 : i32
    %c0_i32_0 = arith.constant 0 : i32
    %c0_i32_1 = arith.constant 0 : i32
    return %arg0, %c0_i32, %arg1, %c0_i32_0 : i32, i32, i32, i32
  }
}

</mosaic_0001>

<llo_original>
// kernel: tpu_custom_call.1
$region0: #{tpu_custom_call.1}
  #allocation0 [shape = 'u32[]', space=smem, size = 0x4, offset = 0x4, fixed_abs, tag = 'smem constant byte address 0x4 - core index']
  #allocation1 [shape = 'u32[144,128]{1,0:T(1,128)}', space=vmem, size = 0x12000, scoped, tag = 'internal scratch']
  %s0 = inlined_call_operand.vmem [shape: f32[2,8,32], index: 0, kind: input, shape index: {}]
  %s1 = inlined_call_operand.vmem [shape: f32[4,32,8], index: 1, kind: input, shape index: {}]
  %s2 = inlined_call_operand.vmem [shape: f32[4,32,8], index: 2, kind: input, shape index: {}]
  %s3 = inlined_call_operand.vmem [shape: f32[4,32,8], index: 3, kind: input, shape index: {}]
  %s4 = inlined_call_operand.hbm [shape: f32[2,4,8,8], index: 4, kind: output, shape index: {0}]
  %s5 = inlined_call_operand.hbm [shape: f32[2,4,8,8], index: 5, kind: output, shape index: {1}]
  %s6 = inlined_call_operand.hbm [shape: f32[2,4,8,8], index: 6, kind: output, shape index: {2}]
  %7 = xla_tuple %s4, %s5, %s6
  %s8 = sld [smem:[#allocation0]]
  $region65: #{tpu_custom_call.1} parent=0
    _
  %s10 = ssub.s32 1, %s8
  %s11 = scalar_select 0, %s10, %s8
  $region1: #{tpu_custom_call.1} parent=0
    #allocation2 [shape = 'u8[32768]{0}', space=vmem, size = 0x8000, scoped, tag = 'output window, operand 0']
    #allocation3 [shape = 's32[2]{0}', space=sflag, size = 0x8, scoped, tag = 'scoped memory for tpu_custom_call.1']
    #allocation4 [shape = 'u8[32768]{0}', space=vmem, size = 0x8000, scoped, tag = 'output window, operand 1']
    #allocation5 [shape = 's32[2]{0}', space=sflag, size = 0x8, scoped, tag = 'scoped memory for tpu_custom_call.1']
    #allocation6 [shape = 'u8[32768]{0}', space=vmem, size = 0x8000, scoped, tag = 'output window, operand 2']
    %12 = vsyncpa [#allocation3], 0
    %s13 = scalar_lea.sflag [#allocation3], 1
    %14 = vsyncpa %s13, 0
    %15 = vsyncpa [#allocation5], 0
    %s16 = scalar_lea.sflag [#allocation5], 1
    %17 = vsyncpa %s16, 0
    loop: start=0, step=1, limit=4
    $region2: #{tpu_custom_call.1} parent=1 // loop_pre_header
      _
    $region3: #{tpu_custom_call.1} parent=1 // loop_header
      %s19 = sphi 0, %s23
      %p20 = scmp.ge.s32.totalorder %s19, 4
      %s26 = sphi 0, %s38
      %s27 = sphi 0, %s34
      %s28 = sphi 0, %s26
      %s29 = sphi 0, %s27
      %s30 = sphi 0, %s28
      %s31 = sphi 0, %s29
      %s43 = sphi 0, %s45
      %s46 = sphi 0, %s43
      %s47 = sphi 0, %s46
      %s63 = sphi 0, %s47
      %s67 = sphi 0, %s67
      %s69 = sphi 0, %s67
      %s70 = sphi 0, %s69
      %s84 = sphi 0, %s70
      %s88 = sphi 0, %s88
      %s90 = sphi 0, %s88
      %s91 = sphi 0, %s90
      %s105 = sphi 0, %s91
      %s109 = sphi 0, %s109
      %s111 = sphi 0, %s109
      %s112 = sphi 0, %s111
      %s126 = sphi 0, %s112
      %s134 = sphi 0, %s136
      %s137 = sphi 0, %s134
      %s138 = sphi 0, %s137
      %s154 = sphi 0, %s138
      %s162 = sphi 0, %s164
      %s165 = sphi 0, %s162
      %s166 = sphi 0, %s165
      %s182 = sphi 0, %s166
      %s190 = sphi 0, %s192
      %s193 = sphi 0, %s190
      %s194 = sphi 0, %s193
      %s210 = sphi 0, %s194
    $region4: #{tpu_custom_call.1} parent=1 // loop_header_branch
      %22 = sbr.rel (%p20) target = $region8
    $region5: #{tpu_custom_call.1} parent=1 // loop_body
      %s24 = ssub.s32 %s19, 1
      %s25 = ssub.s32 %s19, 2
      %s32 = sadd.s32 1, %s27
      %p33 = scmp.ge.s32.totalorder %s32, 1
      %s34 = scalar_select %p33, 0, %s32
      %s35 = sadd.s32 1, %s26
      %s36 = scalar_select %p33, %s35, %s26
      %p37 = scmp.ge.s32.totalorder %s36, 2
      %s38 = scalar_select %p37, 0, %s36
      %s39 = ssub.s32 %s26, %s38
      %s40 = ssub.s32 %s27, %s34
      %s41 = sor.u32 %s39, %s40
      %p42 = scmp.eq.s32.totalorder %s41, 0
      %s44 = sadd.s32 %s43, 1
      %s45 = scalar_select %p42, %s43, %s44
      %p48 = pneg %p42
      %p49 = scmp.eq.s32.totalorder %s19, 1
      %p50 = por %p48, %p49
      %p51 = scmp.ne.s32.totalorder %s43, %s46
      %p52 = scmp.eq.s32.totalorder %s19, 0
      %p53 = por %p51, %p52
      %p54 = scmp.ne.s32.totalorder %s43, %s46
      %p55 = scmp.eq.s32.totalorder %s24, 1
      %p56 = por %p54, %p55
      %p57 = scmp.ne.s32.totalorder %s46, %s47
      %p58 = scmp.eq.s32.totalorder %s24, 0
      %p59 = por %p57, %p58
      %p60 = scmp.ne.s32.totalorder %s46, %s47
      %p61 = scmp.eq.s32.totalorder %s25, 1
      %p62 = por %p60, %p61
      %p64 = scmp.ne.s32.totalorder %s47, %s63
      %p65 = scmp.eq.s32.totalorder %s25, 0
      %p66 = por %p64, %p65
      %s68 = sadd.s32 %s67, 1
      %p71 = scmp.eq.s32.totalorder %s19, 1
      %p72 = scmp.ne.s32.totalorder %s67, %s69
      %p73 = scmp.eq.s32.totalorder %s19, 0
      %p74 = por %p72, %p73
      %p75 = scmp.ne.s32.totalorder %s67, %s69
      %p76 = scmp.eq.s32.totalorder %s24, 1
      %p77 = por %p75, %p76
      %p78 = scmp.ne.s32.totalorder %s69, %s70
      %p79 = scmp.eq.s32.totalorder %s24, 0
      %p80 = por %p78, %p79
      %p81 = scmp.ne.s32.totalorder %s69, %s70
      %p82 = scmp.eq.s32.totalorder %s25, 1
      %p83 = por %p81, %p82
      %p85 = scmp.ne.s32.totalorder %s70, %s84
      %p86 = scmp.eq.s32.totalorder %s25, 0
      %p87 = por %p85, %p86
      %s89 = sadd.s32 %s88, 1
      %p92 = scmp.eq.s32.totalorder %s19, 1
      %p93 = scmp.ne.s32.totalorder %s88, %s90
      %p94 = scmp.eq.s32.totalorder %s19, 0
      %p95 = por %p93, %p94
      %p96 = scmp.ne.s32.totalorder %s88, %s90
      %p97 = scmp.eq.s32.totalorder %s24, 1
      %p98 = por %p96, %p97
      %p99 = scmp.ne.s32.totalorder %s90, %s91
      %p100 = scmp.eq.s32.totalorder %s24, 0
      %p101 = por %p99, %p100
      %p102 = scmp.ne.s32.totalorder %s90, %s91
      %p103 = scmp.eq.s32.totalorder %s25, 1
      %p104 = por %p102, %p103
      %p106 = scmp.ne.s32.totalorder %s91, %s105
      %p107 = scmp.eq.s32.totalorder %s25, 0
      %p108 = por %p106, %p107
      %s110 = sadd.s32 %s109, 1
      %p113 = scmp.eq.s32.totalorder %s19, 1
      %p114 = scmp.ne.s32.totalorder %s109, %s111
      %p115 = scmp.eq.s32.totalorder %s19, 0
      %p116 = por %p114, %p115
      %p117 = scmp.ne.s32.totalorder %s109, %s111
      %p118 = scmp.eq.s32.totalorder %s24, 1
      %p119 = por %p117, %p118
      %p120 = scmp.ne.s32.totalorder %s111, %s112
      %p121 = scmp.eq.s32.totalorder %s24, 0
      %p122 = por %p120, %p121
      %p123 = scmp.ne.s32.totalorder %s111, %s112
      %p124 = scmp.eq.s32.totalorder %s25, 1
      %p125 = por %p123, %p124
      %p127 = scmp.ne.s32.totalorder %s112, %s126
      %p128 = scmp.eq.s32.totalorder %s25, 0
      %p129 = por %p127, %p128
      %s130 = ssub.s32 %s26, %s38
      %s131 = ssub.s32 %s27, %s34
      %s132 = sor.u32 %s130, %s131
      %p133 = scmp.eq.s32.totalorder %s132, 0
      %s135 = sadd.s32 %s134, 1
      %s136 = scalar_select %p133, %s134, %s135
      %p139 = pneg %p133
      %p140 = scmp.eq.s32.totalorder %s19, 1
      %p141 = por %p139, %p140
      %p142 = scmp.ne.s32.totalorder %s134, %s137
      %p143 = scmp.eq.s32.totalorder %s19, 0
      %p144 = por %p142, %p143
      %p145 = scmp.ne.s32.totalorder %s134, %s137
      %p146 = scmp.eq.s32.totalorder %s24, 1
      %p147 = por %p145, %p146
      %p148 = scmp.ne.s32.totalorder %s137, %s138
      %p149 = scmp.eq.s32.totalorder %s24, 0
      %p150 = por %p148, %p149
      %p151 = scmp.ne.s32.totalorder %s137, %s138
      %p152 = scmp.eq.s32.totalorder %s25, 1
      %p153 = por %p151, %p152
      %p155 = scmp.ne.s32.totalorder %s138, %s154
      %p156 = scmp.eq.s32.totalorder %s25, 0
      %p157 = por %p155, %p156
      %s158 = ssub.s32 %s26, %s38
      %s159 = ssub.s32 %s27, %s34
      %s160 = sor.u32 %s158, %s159
      %p161 = scmp.eq.s32.totalorder %s160, 0
      %s163 = sadd.s32 %s162, 1
      %s164 = scalar_select %p161, %s162, %s163
      %p167 = pneg %p161
      %p168 = scmp.eq.s32.totalorder %s19, 1
      %p169 = por %p167, %p168
      %p170 = scmp.ne.s32.totalorder %s162, %s165
      %p171 = scmp.eq.s32.totalorder %s19, 0
      %p172 = por %p170, %p171
      %p173 = scmp.ne.s32.totalorder %s162, %s165
      %p174 = scmp.eq.s32.totalorder %s24, 1
      %p175 = por %p173, %p174
      %p176 = scmp.ne.s32.totalorder %s165, %s166
      %p177 = scmp.eq.s32.totalorder %s24, 0
      %p178 = por %p176, %p177
      %p179 = scmp.ne.s32.totalorder %s165, %s166
      %p180 = scmp.eq.s32.totalorder %s25, 1
      %p181 = por %p179, %p180
      %p183 = scmp.ne.s32.totalorder %s166, %s182
      %p184 = scmp.eq.s32.totalorder %s25, 0
      %p185 = por %p183, %p184
      %s186 = ssub.s32 %s26, %s38
      %s187 = ssub.s32 %s27, %s34
      %s188 = sor.u32 %s186, %s187
      %p189 = scmp.eq.s32.totalorder %s188, 0
      %s191 = sadd.s32 %s190, 1
      %s192 = scalar_select %p189, %s190, %s191
      %p195 = pneg %p189
      %p196 = scmp.eq.s32.totalorder %s19, 1
      %p197 = por %p195, %p196
      %p198 = scmp.ne.s32.totalorder %s190, %s193
      %p199 = scmp.eq.s32.totalorder %s19, 0
      %p200 = por %p198, %p199
      %p201 = scmp.ne.s32.totalorder %s190, %s193
      %p202 = scmp.eq.s32.totalorder %s24, 1
      %p203 = por %p201, %p202
      %p204 = scmp.ne.s32.totalorder %s193, %s194
      %p205 = scmp.eq.s32.totalorder %s24, 0
      %p206 = por %p204, %p205
      %p207 = scmp.ne.s32.totalorder %s193, %s194
      %p208 = scmp.eq.s32.totalorder %s25, 1
      %p209 = por %p207, %p208
      %p211 = scmp.ne.s32.totalorder %s194, %s210
      %p212 = scmp.eq.s32.totalorder %s25, 0
      %p213 = por %p211, %p212
      %p214 = scmp.le.s32.totalorder 1, %s19
      %p215 = scmp.lt.s32.totalorder %s19, 3
      %p216 = pnand %p214, %p215
      %p217 = pneg %p216
      // Predicated region
      $region9: #{tpu_custom_call.1} parent=5 // pred_check
        _
      $region10: #{tpu_custom_call.1} parent=5 // pred_check_branch
        %219 = sbr.rel (%p216) target = $region12
      $region11: #{tpu_custom_call.1} parent=5 // pred_region
        %s220 = ssub.s32 %s19, 1
        // Predicated region
        $region13: #{tpu_custom_call.1} parent=11 // pred_check
          %p221 = pneg %p80
        $region14: #{tpu_custom_call.1} parent=11 // pred_check_branch
          %223 = sbr.rel (%p221) target = $region16
        $region15: #{tpu_custom_call.1} parent=11 // pred_region
          _
        $region16: #{tpu_custom_call.1} parent=11 // pred_fallthru
          _
        // Predicated region
        $region17: #{tpu_custom_call.1} parent=11 // pred_check
          %p224 = pneg %p101
        $region18: #{tpu_custom_call.1} parent=11 // pred_check_branch
          %226 = sbr.rel (%p224) target = $region20
        $region19: #{tpu_custom_call.1} parent=11 // pred_region
          _
        $region20: #{tpu_custom_call.1} parent=11 // pred_fallthru
          _
        // Predicated region
        $region21: #{tpu_custom_call.1} parent=11 // pred_check
          %p227 = pneg %p122
        $region22: #{tpu_custom_call.1} parent=11 // pred_check_branch
          %229 = sbr.rel (%p227) target = $region24
        $region23: #{tpu_custom_call.1} parent=11 // pred_region
          _
        $region24: #{tpu_custom_call.1} parent=11 // pred_fallthru
          _
      $region12: #{tpu_custom_call.1} parent=5 // pred_fallthru
        _
      %p230 = scmp.lt.s32.totalorder %s19, 2
      // Predicated region
      $region25: #{tpu_custom_call.1} parent=5 // pred_check
        %p231 = pneg %p230
      $region26: #{tpu_custom_call.1} parent=5 // pred_check_branch
        %233 = sbr.rel (%p231) target = $region28
      $region27: #{tpu_custom_call.1} parent=5 // pred_region
        // Predicated region
        $region29: #{tpu_custom_call.1} parent=27 // pred_check
          %p234 = pneg %p53
        $region30: #{tpu_custom_call.1} parent=27 // pred_check_branch
          %236 = sbr.rel (%p234) target = $region32
        $region31: #{tpu_custom_call.1} parent=27 // pred_region
          %p237 = scmp.lt.s32.totalorder %s26, 1
          %s238 = scalar_select %p237, %s26, 1
          %p239 = scmp.lt.s32.totalorder %s27, 0
          %s240 = scalar_select %p239, %s27, 0
          %s241 = sadd.s32 %s240, %s238
          %s242 = smul.addr %s241, 8
          %s243 = scalar_lea.vmem %s0, %s242
        $region32: #{tpu_custom_call.1} parent=27 // pred_fallthru
          _
      $region28: #{tpu_custom_call.1} parent=5 // pred_fallthru
        _
      %p244 = scmp.le.s32.totalorder 1, %s19
      %p245 = scmp.lt.s32.totalorder %s19, 3
      %p246 = pnand %p244, %p245
      %p247 = pneg %p246
      // Predicated region
      $region33: #{tpu_custom_call.1} parent=5 // pred_check
        _
      $region34: #{tpu_custom_call.1} parent=5 // pred_check_branch
        %249 = sbr.rel (%p246) target = $region36
      $region35: #{tpu_custom_call.1} parent=5 // pred_region
        %s250 = ssub.s32 %s19, 1
        %p251 = scmp.lt.s32.totalorder %s28, 1
        %s252 = scalar_select %p251, %s28, 1
        %p253 = scmp.lt.s32.totalorder %s29, 0
        %s254 = scalar_select %p253, %s29, 0
        %s255 = sadd.s32 %s254, %s252
        %s256 = smul.addr %s255, 8
        %s257 = scalar_lea.vmem %s0, %s256
        %p258 = pneg %p59
        %p259 = pneg %p56
        %p260 = pneg %p80
        %p261 = pneg %p77
        %p262 = pneg %p101
        %p263 = pneg %p98
        %p264 = pneg %p122
        %p265 = pneg %p119
        %p266 = pneg %p150
        %p267 = pneg %p147
        %s268 = sand.u32 %s137, 1
        %s269 = scalar_lea.sflag [#allocation3], %s268
        %s270 = sand.u32 %s137, 1
        %s271 = smul.addr %s270, 32
        %s272 = scalar_lea.vmem [#allocation2], %s271
        %p273 = pneg %p178
        %p274 = pneg %p175
        %s275 = sand.u32 %s24, 1
        %s276 = scalar_lea.sflag [#allocation5], %s275
        %s277 = sand.u32 %s165, 1
        %s278 = smul.addr %s277, 32
        %s279 = scalar_lea.vmem [#allocation4], %s278
        %p280 = pneg %p206
        %p281 = pneg %p203
        %s282 = sand.u32 %s24, 1
        %s283 = scalar_lea.sflag [#allocation5], %s282
        %s284 = sand.u32 %s193, 1
        %s285 = smul.addr %s284, 32
        %s286 = scalar_lea.vmem [#allocation6], %s285
        %p287 = scmp.lt.s32.totalorder %s28, 1
        %s288 = scalar_select %p287, %s28, 1
        %p289 = scmp.lt.s32.totalorder %s29, 0
        %s290 = scalar_select %p289, %s29, 0
        %s291 = sadd.s32 %s290, %s288
        %s292 = smul.addr %s291, 8
        %s293 = scalar_lea.vmem %s0, %s292
        %v294 = vld [vmem:[%s293] sm:$0xff]
        %v295 = vld [vmem:[%s1] sm:$0xff]
        %v296 = vld [vmem:[%s1 + $0x8] sm:$0xff]
        %v297 = vld [vmem:[%s1 + $0x10] sm:$0xff]
        %v298 = vld [vmem:[%s1 + $0x18] sm:$0xff]
        %vm299 = vcmask 261120
        %v301 = vsel %vm299, %v294, 0
        %303 = vmatprep.subr.mxu0 0.0
        %304 = vmatpush1.msra.mxu0 %v295
        %305 = vmatprep.subr.mxu0 0.0
        %306 = vmatpush1.msra.mxu0 %v296
        %307 = vmatprep.subr.mxu0 0.0
        %308 = vmatpush1.msra.mxu0 %v297
        %309 = vmatprep.subr.mxu0 0.0
        %310 = vmatpush1.msra.mxu0 %v298
        %311 = vmatprep.subr.mxu0 0.0
        %312 = vmatpush1.msra.mxu0 0.0
        %313 = vmatprep.subr.mxu0 0.0
        %314 = vmatpush1.msra.mxu0 0.0
        %315 = vmatprep.subr.mxu0 0.0
        %316 = vmatpush1.msra.mxu0 0.0
        %317 = vmatprep.subr.mxu0 0.0
        %318 = vmatpush1.msra.mxu0 0.0
        %319 = vmatprep.subr.mxu0 0.0
        %320 = vmatpush1.msra.mxu0 0.0
        %321 = vmatprep.subr.mxu0 0.0
        %322 = vmatpush1.msra.mxu0 0.0
        %323 = vmatprep.subr.mxu0 0.0
        %324 = vmatpush1.msra.mxu0 0.0
        %325 = vmatprep.subr.mxu0 0.0
        %326 = vmatpush1.msra.mxu0 0.0
        %327 = vmatprep.subr.mxu0 0.0
        %328 = vmatpush1.msra.mxu0 0.0
        %329 = vmatprep.subr.mxu0 0.0
        %330 = vmatpush1.msra.mxu0 0.0
        %331 = vmatprep.subr.mxu0 0.0
        %332 = vmatpush1.msra.mxu0 0.0
        %333 = vmatprep.subr.mxu0 0.0
        %334 = vmatpush1.msra.mxu0 0.0
        %335 = vmatprep.subr.mxu0 0.0
        %336 = vmatpush1.msra.mxu0 0.0
        %337 = vmatprep.subr.mxu0 0.0
        %338 = vmatpush1.msra.mxu0 0.0
        %339 = vmatprep.subr.mxu0 0.0
        %340 = vmatpush1.msra.mxu0 0.0
        %341 = vmatprep.subr.mxu0 0.0
        %342 = vmatpush1.msra.mxu0 0.0
        %343 = vmatprep.subr.mxu0 0.0
        %344 = vmatpush1.msra.mxu0 0.0
        %345 = vmatprep.subr.mxu0 0.0
        %346 = vmatpush1.msra.mxu0 0.0
        %347 = vmatprep.subr.mxu0 0.0
        %348 = vmatpush1.msra.mxu0 0.0
        %349 = vmatprep.subr.mxu0 0.0
        %350 = vmatpush1.msra.mxu0 0.0
        %351 = vmatprep.subr.mxu0 0.0
        %352 = vmatpush1.msra.mxu0 0.0
        %353 = vmatprep.subr.mxu0 0.0
        %354 = vmatpush1.msra.mxu0 0.0
        %355 = vmatprep.subr.mxu0 0.0
        %356 = vmatpush1.msra.mxu0 0.0
        %357 = vmatprep.subr.mxu0 0.0
        %358 = vmatpush1.msra.mxu0 0.0
        %359 = vmatprep.subr.mxu0 0.0
        %360 = vmatpush1.msra.mxu0 0.0
        %361 = vmatprep.subr.mxu0 0.0
        %362 = vmatpush1.msra.mxu0 0.0
        %363 = vmatprep.subr.mxu0 0.0
        %364 = vmatpush1.msra.mxu0 0.0
        %365 = vmatprep.subr.mxu0 0.0
        %366 = vmatpush1.msra.mxu0 0.0
        %367 = vmatprep.mubr.f32.mxu0 0.0
        %368 = vmatmul.mubr.f32.gmra.mrb[0].mxu0 %v301
        %v369 = vpop.f32.mrb[0].mxu0
        %v370 = vadd.f32 0.0, %v369
        %v371 = vpop.f32.mrb[0].mxu0
        %372 = vdwg.mxu0
        %vm373 = vcmask 64512
        %374 = vst.msk [vmem:[%s272] sm:$0xff] %vm373, %v370
        %v375 = vld [vmem:[%s2] sm:$0xff]
        %v376 = vld [vmem:[%s2 + $0x8] sm:$0xff]
        %v377 = vld [vmem:[%s2 + $0x10] sm:$0xff]
        %v378 = vld [vmem:[%s2 + $0x18] sm:$0xff]
        %379 = vmatprep.subr.mxu0 0.0
        %380 = vmatpush1.msra.mxu0 %v375
        %381 = vmatprep.subr.mxu0 0.0
        %382 = vmatpush1.msra.mxu0 %v376
        %383 = vmatprep.subr.mxu0 0.0
        %384 = vmatpush1.msra.mxu0 %v377
        %385 = vmatprep.subr.mxu0 0.0
        %386 = vmatpush1.msra.mxu0 %v378
        %387 = vmatprep.subr.mxu0 0.0
        %388 = vmatpush1.msra.mxu0 0.0
        %389 = vmatprep.subr.mxu0 0.0
        %390 = vmatpush1.msra.mxu0 0.0
        %391 = vmatprep.subr.mxu0 0.0
        %392 = vmatpush1.msra.mxu0 0.0
        %393 = vmatprep.subr.mxu0 0.0
        %394 = vmatpush1.msra.mxu0 0.0
        %395 = vmatprep.subr.mxu0 0.0
        %396 = vmatpush1.msra.mxu0 0.0
        %397 = vmatprep.subr.mxu0 0.0
        %398 = vmatpush1.msra.mxu0 0.0
        %399 = vmatprep.subr.mxu0 0.0
        %400 = vmatpush1.msra.mxu0 0.0
        %401 = vmatprep.subr.mxu0 0.0
        %402 = vmatpush1.msra.mxu0 0.0
        %403 = vmatprep.subr.mxu0 0.0
        %404 = vmatpush1.msra.mxu0 0.0
        %405 = vmatprep.subr.mxu0 0.0
        %406 = vmatpush1.msra.mxu0 0.0
        %407 = vmatprep.subr.mxu0 0.0
        %408 = vmatpush1.msra.mxu0 0.0
        %409 = vmatprep.subr.mxu0 0.0
        %410 = vmatpush1.msra.mxu0 0.0
        %411 = vmatprep.subr.mxu0 0.0
        %412 = vmatpush1.msra.mxu0 0.0
        %413 = vmatprep.subr.mxu0 0.0
        %414 = vmatpush1.msra.mxu0 0.0
        %415 = vmatprep.subr.mxu0 0.0
        %416 = vmatpush1.msra.mxu0 0.0
        %417 = vmatprep.subr.mxu0 0.0
        %418 = vmatpush1.msra.mxu0 0.0
        %419 = vmatprep.subr.mxu0 0.0
        %420 = vmatpush1.msra.mxu0 0.0
        %421 = vmatprep.subr.mxu0 0.0
        %422 = vmatpush1.msra.mxu0 0.0
        %423 = vmatprep.subr.mxu0 0.0
        %424 = vmatpush1.msra.mxu0 0.0
        %425 = vmatprep.subr.mxu0 0.0
        %426 = vmatpush1.msra.mxu0 0.0
        %427 = vmatprep.subr.mxu0 0.0
        %428 = vmatpush1.msra.mxu0 0.0
        %429 = vmatprep.subr.mxu0 0.0
        %430 = vmatpush1.msra.mxu0 0.0
        %431 = vmatprep.subr.mxu0 0.0
        %432 = vmatpush1.msra.mxu0 0.0
        %433 = vmatprep.subr.mxu0 0.0
        %434 = vmatpush1.msra.mxu0 0.0
        %435 = vmatprep.subr.mxu0 0.0
        %436 = vmatpush1.msra.mxu0 0.0
        %437 = vmatprep.subr.mxu0 0.0
        %438 = vmatpush1.msra.mxu0 0.0
        %439 = vmatprep.subr.mxu0 0.0
        %440 = vmatpush1.msra.mxu0 0.0
        %441 = vmatprep.subr.mxu0 0.0
        %442 = vmatpush1.msra.mxu0 0.0
        %443 = vmatprep.mubr.f32.mxu0 0.0
        %444 = vmatmul.mubr.f32.gmra.mrb[0].mxu0 %v301
        %v445 = vpop.f32.mrb[0].mxu0
        %v446 = vadd.f32 0.0, %v445
        %v447 = vpop.f32.mrb[0].mxu0
        %448 = vdwg.mxu0
        %449 = vst.msk [vmem:[%s279] sm:$0xff] %vm373, %v446
        %v450 = vld [vmem:[%s3] sm:$0xff]
        %v451 = vld [vmem:[%s3 + $0x8] sm:$0xff]
        %v452 = vld [vmem:[%s3 + $0x10] sm:$0xff]
        %v453 = vld [vmem:[%s3 + $0x18] sm:$0xff]
        %454 = vmatprep.subr.mxu0 0.0
        %455 = vmatpush1.msra.mxu0 %v450
        %456 = vmatprep.subr.mxu0 0.0
        %457 = vmatpush1.msra.mxu0 %v451
        %458 = vmatprep.subr.mxu0 0.0
        %459 = vmatpush1.msra.mxu0 %v452
        %460 = vmatprep.subr.mxu0 0.0
        %461 = vmatpush1.msra.mxu0 %v453
        %462 = vmatprep.subr.mxu0 0.0
        %463 = vmatpush1.msra.mxu0 0.0
        %464 = vmatprep.subr.mxu0 0.0
        %465 = vmatpush1.msra.mxu0 0.0
        %466 = vmatprep.subr.mxu0 0.0
        %467 = vmatpush1.msra.mxu0 0.0
        %468 = vmatprep.subr.mxu0 0.0
        %469 = vmatpush1.msra.mxu0 0.0
        %470 = vmatprep.subr.mxu0 0.0
        %471 = vmatpush1.msra.mxu0 0.0
        %472 = vmatprep.subr.mxu0 0.0
        %473 = vmatpush1.msra.mxu0 0.0
        %474 = vmatprep.subr.mxu0 0.0
        %475 = vmatpush1.msra.mxu0 0.0
        %476 = vmatprep.subr.mxu0 0.0
        %477 = vmatpush1.msra.mxu0 0.0
        %478 = vmatprep.subr.mxu0 0.0
        %479 = vmatpush1.msra.mxu0 0.0
        %480 = vmatprep.subr.mxu0 0.0
        %481 = vmatpush1.msra.mxu0 0.0
        %482 = vmatprep.subr.mxu0 0.0
        %483 = vmatpush1.msra.mxu0 0.0
        %484 = vmatprep.subr.mxu0 0.0
        %485 = vmatpush1.msra.mxu0 0.0
        %486 = vmatprep.subr.mxu0 0.0
        %487 = vmatpush1.msra.mxu0 0.0
        %488 = vmatprep.subr.mxu0 0.0
        %489 = vmatpush1.msra.mxu0 0.0
        %490 = vmatprep.subr.mxu0 0.0
        %491 = vmatpush1.msra.mxu0 0.0
        %492 = vmatprep.subr.mxu0 0.0
        %493 = vmatpush1.msra.mxu0 0.0
        %494 = vmatprep.subr.mxu0 0.0
        %495 = vmatpush1.msra.mxu0 0.0
        %496 = vmatprep.subr.mxu0 0.0
        %497 = vmatpush1.msra.mxu0 0.0
        %498 = vmatprep.subr.mxu0 0.0
        %499 = vmatpush1.msra.mxu0 0.0
        %500 = vmatprep.subr.mxu0 0.0
        %501 = vmatpush1.msra.mxu0 0.0
        %502 = vmatprep.subr.mxu0 0.0
        %503 = vmatpush1.msra.mxu0 0.0
        %504 = vmatprep.subr.mxu0 0.0
        %505 = vmatpush1.msra.mxu0 0.0
        %506 = vmatprep.subr.mxu0 0.0
        %507 = vmatpush1.msra.mxu0 0.0
        %508 = vmatprep.subr.mxu0 0.0
        %509 = vmatpush1.msra.mxu0 0.0
        %510 = vmatprep.subr.mxu0 0.0
        %511 = vmatpush1.msra.mxu0 0.0
        %512 = vmatprep.subr.mxu0 0.0
        %513 = vmatpush1.msra.mxu0 0.0
        %514 = vmatprep.subr.mxu0 0.0
        %515 = vmatpush1.msra.mxu0 0.0
        %516 = vmatprep.subr.mxu0 0.0
        %517 = vmatpush1.msra.mxu0 0.0
        %518 = vmatprep.mubr.f32.mxu0 0.0
        %519 = vmatmul.mubr.f32.gmra.mrb[0].mxu0 %v301
        %v520 = vpop.f32.mrb[0].mxu0
        %v521 = vadd.f32 0.0, %v520
        %v522 = vpop.f32.mrb[0].mxu0
        %523 = vdwg.mxu0
        %524 = vst.msk [vmem:[%s286] sm:$0xff] %vm373, %v521
        %s525 = scalar_lea.vmem %s1, 32
        %v526 = vld [vmem:[%s525] sm:$0xff]
        %v527 = vld [vmem:[%s525 + $0x8] sm:$0xff]
        %v528 = vld [vmem:[%s525 + $0x10] sm:$0xff]
        %v529 = vld [vmem:[%s525 + $0x18] sm:$0xff]
        %530 = vmatprep.subr.mxu0 0.0
        %531 = vmatpush1.msra.mxu0 %v526
        %532 = vmatprep.subr.mxu0 0.0
        %533 = vmatpush1.msra.mxu0 %v527
        %534 = vmatprep.subr.mxu0 0.0
        %535 = vmatpush1.msra.mxu0 %v528
        %536 = vmatprep.subr.mxu0 0.0
        %537 = vmatpush1.msra.mxu0 %v529
        %538 = vmatprep.subr.mxu0 0.0
        %539 = vmatpush1.msra.mxu0 0.0
        %540 = vmatprep.subr.mxu0 0.0
        %541 = vmatpush1.msra.mxu0 0.0
        %542 = vmatprep.subr.mxu0 0.0
        %543 = vmatpush1.msra.mxu0 0.0
        %544 = vmatprep.subr.mxu0 0.0
        %545 = vmatpush1.msra.mxu0 0.0
        %546 = vmatprep.subr.mxu0 0.0
        %547 = vmatpush1.msra.mxu0 0.0
        %548 = vmatprep.subr.mxu0 0.0
        %549 = vmatpush1.msra.mxu0 0.0
        %550 = vmatprep.subr.mxu0 0.0
        %551 = vmatpush1.msra.mxu0 0.0
        %552 = vmatprep.subr.mxu0 0.0
        %553 = vmatpush1.msra.mxu0 0.0
        %554 = vmatprep.subr.mxu0 0.0
        %555 = vmatpush1.msra.mxu0 0.0
        %556 = vmatprep.subr.mxu0 0.0
        %557 = vmatpush1.msra.mxu0 0.0
        %558 = vmatprep.subr.mxu0 0.0
        %559 = vmatpush1.msra.mxu0 0.0
        %560 = vmatprep.subr.mxu0 0.0
        %561 = vmatpush1.msra.mxu0 0.0
        %562 = vmatprep.subr.mxu0 0.0
        %563 = vmatpush1.msra.mxu0 0.0
        %564 = vmatprep.subr.mxu0 0.0
        %565 = vmatpush1.msra.mxu0 0.0
        %566 = vmatprep.subr.mxu0 0.0
        %567 = vmatpush1.msra.mxu0 0.0
        %568 = vmatprep.subr.mxu0 0.0
        %569 = vmatpush1.msra.mxu0 0.0
        %570 = vmatprep.subr.mxu0 0.0
        %571 = vmatpush1.msra.mxu0 0.0
        %572 = vmatprep.subr.mxu0 0.0
        %573 = vmatpush1.msra.mxu0 0.0
        %574 = vmatprep.subr.mxu0 0.0
        %575 = vmatpush1.msra.mxu0 0.0
        %576 = vmatprep.subr.mxu0 0.0
        %577 = vmatpush1.msra.mxu0 0.0
        %578 = vmatprep.subr.mxu0 0.0
        %579 = vmatpush1.msra.mxu0 0.0
        %580 = vmatprep.subr.mxu0 0.0
        %581 = vmatpush1.msra.mxu0 0.0
        %582 = vmatprep.subr.mxu0 0.0
        %583 = vmatpush1.msra.mxu0 0.0
        %584 = vmatprep.subr.mxu0 0.0
        %585 = vmatpush1.msra.mxu0 0.0
        %586 = vmatprep.subr.mxu0 0.0
        %587 = vmatpush1.msra.mxu0 0.0
        %588 = vmatprep.subr.mxu0 0.0
        %589 = vmatpush1.msra.mxu0 0.0
        %590 = vmatprep.subr.mxu0 0.0
        %591 = vmatpush1.msra.mxu0 0.0
        %592 = vmatprep.subr.mxu0 0.0
        %593 = vmatpush1.msra.mxu0 0.0
        %594 = vmatprep.mubr.f32.mxu0 0.0
        %595 = vmatmul.mubr.f32.gmra.mrb[0].mxu0 %v301
        %v596 = vpop.f32.mrb[0].mxu0
        %v597 = vadd.f32 0.0, %v596
        %v598 = vpop.f32.mrb[0].mxu0
        %599 = vdwg.mxu0
        %s600 = scalar_lea.vmem %s272, 8 [#allocation2]
        %601 = vst.msk [vmem:[%s600] sm:$0xff] %vm373, %v597
        %s602 = scalar_lea.vmem %s2, 32
        %v603 = vld [vmem:[%s602] sm:$0xff]
        %v604 = vld [vmem:[%s602 + $0x8] sm:$0xff]
        %v605 = vld [vmem:[%s602 + $0x10] sm:$0xff]
        %v606 = vld [vmem:[%s602 + $0x18] sm:$0xff]
        %607 = vmatprep.subr.mxu0 0.0
        %608 = vmatpush1.msra.mxu0 %v603
        %609 = vmatprep.subr.mxu0 0.0
        %610 = vmatpush1.msra.mxu0 %v604
        %611 = vmatprep.subr.mxu0 0.0
        %612 = vmatpush1.msra.mxu0 %v605
        %613 = vmatprep.subr.mxu0 0.0
        %614 = vmatpush1.msra.mxu0 %v606
        %615 = vmatprep.subr.mxu0 0.0
        %616 = vmatpush1.msra.mxu0 0.0
        %617 = vmatprep.subr.mxu0 0.0
        %618 = vmatpush1.msra.mxu0 0.0
        %619 = vmatprep.subr.mxu0 0.0
        %620 = vmatpush1.msra.mxu0 0.0
        %621 = vmatprep.subr.mxu0 0.0
        %622 = vmatpush1.msra.mxu0 0.0
        %623 = vmatprep.subr.mxu0 0.0
        %624 = vmatpush1.msra.mxu0 0.0
        %625 = vmatprep.subr.mxu0 0.0
        %626 = vmatpush1.msra.mxu0 0.0
        %627 = vmatprep.subr.mxu0 0.0
        %628 = vmatpush1.msra.mxu0 0.0
        %629 = vmatprep.subr.mxu0 0.0
        %630 = vmatpush1.msra.mxu0 0.0
        %631 = vmatprep.subr.mxu0 0.0
        %632 = vmatpush1.msra.mxu0 0.0
        %633 = vmatprep.subr.mxu0 0.0
        %634 = vmatpush1.msra.mxu0 0.0
        %635 = vmatprep.subr.mxu0 0.0
        %636 = vmatpush1.msra.mxu0 0.0
        %637 = vmatprep.subr.mxu0 0.0
        %638 = vmatpush1.msra.mxu0 0.0
        %639 = vmatprep.subr.mxu0 0.0
        %640 = vmatpush1.msra.mxu0 0.0
        %641 = vmatprep.subr.mxu0 0.0
        %642 = vmatpush1.msra.mxu0 0.0
        %643 = vmatprep.subr.mxu0 0.0
        %644 = vmatpush1.msra.mxu0 0.0
        %645 = vmatprep.subr.mxu0 0.0
        %646 = vmatpush1.msra.mxu0 0.0
        %647 = vmatprep.subr.mxu0 0.0
        %648 = vmatpush1.msra.mxu0 0.0
        %649 = vmatprep.subr.mxu0 0.0
        %650 = vmatpush1.msra.mxu0 0.0
        %651 = vmatprep.subr.mxu0 0.0
        %652 = vmatpush1.msra.mxu0 0.0
        %653 = vmatprep.subr.mxu0 0.0
        %654 = vmatpush1.msra.mxu0 0.0
        %655 = vmatprep.subr.mxu0 0.0
        %656 = vmatpush1.msra.mxu0 0.0
        %657 = vmatprep.subr.mxu0 0.0
        %658 = vmatpush1.msra.mxu0 0.0
        %659 = vmatprep.subr.mxu0 0.0
        %660 = vmatpush1.msra.mxu0 0.0
        %661 = vmatprep.subr.mxu0 0.0
        %662 = vmatpush1.msra.mxu0 0.0
        %663 = vmatprep.subr.mxu0 0.0
        %664 = vmatpush1.msra.mxu0 0.0
        %665 = vmatprep.subr.mxu0 0.0
        %666 = vmatpush1.msra.mxu0 0.0
        %667 = vmatprep.subr.mxu0 0.0
        %668 = vmatpush1.msra.mxu0 0.0
        %669 = vmatprep.subr.mxu0 0.0
        %670 = vmatpush1.msra.mxu0 0.0
        %671 = vmatprep.mubr.f32.mxu0 0.0
        %672 = vmatmul.mubr.f32.gmra.mrb[0].mxu0 %v301
        %v673 = vpop.f32.mrb[0].mxu0
        %v674 = vadd.f32 0.0, %v673
        %v675 = vpop.f32.mrb[0].mxu0
        %676 = vdwg.mxu0
        %s677 = scalar_lea.vmem %s279, 8 [#allocation4]
        %678 = vst.msk [vmem:[%s677] sm:$0xff] %vm373, %v674
        %s679 = scalar_lea.vmem %s3, 32
        %v680 = vld [vmem:[%s679] sm:$0xff]
        %v681 = vld [vmem:[%s679 + $0x8] sm:$0xff]
        %v682 = vld [vmem:[%s679 + $0x10] sm:$0xff]
        %v683 = vld [vmem:[%s679 + $0x18] sm:$0xff]
        %684 = vmatprep.subr.mxu0 0.0
        %685 = vmatpush1.msra.mxu0 %v680
        %686 = vmatprep.subr.mxu0 0.0
        %687 = vmatpush1.msra.mxu0 %v681
        %688 = vmatprep.subr.mxu0 0.0
        %689 = vmatpush1.msra.mxu0 %v682
        %690 = vmatprep.subr.mxu0 0.0
        %691 = vmatpush1.msra.mxu0 %v683
        %692 = vmatprep.subr.mxu0 0.0
        %693 = vmatpush1.msra.mxu0 0.0
        %694 = vmatprep.subr.mxu0 0.0
        %695 = vmatpush1.msra.mxu0 0.0
        %696 = vmatprep.subr.mxu0 0.0
        %697 = vmatpush1.msra.mxu0 0.0
        %698 = vmatprep.subr.mxu0 0.0
        %699 = vmatpush1.msra.mxu0 0.0
        %700 = vmatprep.subr.mxu0 0.0
        %701 = vmatpush1.msra.mxu0 0.0
        %702 = vmatprep.subr.mxu0 0.0
        %703 = vmatpush1.msra.mxu0 0.0
        %704 = vmatprep.subr.mxu0 0.0
        %705 = vmatpush1.msra.mxu0 0.0
        %706 = vmatprep.subr.mxu0 0.0
        %707 = vmatpush1.msra.mxu0 0.0
        %708 = vmatprep.subr.mxu0 0.0
        %709 = vmatpush1.msra.mxu0 0.0
        %710 = vmatprep.subr.mxu0 0.0
        %711 = vmatpush1.msra.mxu0 0.0
        %712 = vmatprep.subr.mxu0 0.0
        %713 = vmatpush1.msra.mxu0 0.0
        %714 = vmatprep.subr.mxu0 0.0
        %715 = vmatpush1.msra.mxu0 0.0
        %716 = vmatprep.subr.mxu0 0.0
        %717 = vmatpush1.msra.mxu0 0.0
        %718 = vmatprep.subr.mxu0 0.0
        %719 = vmatpush1.msra.mxu0 0.0
        %720 = vmatprep.subr.mxu0 0.0
        %721 = vmatpush1.msra.mxu0 0.0
        %722 = vmatprep.subr.mxu0 0.0
        %723 = vmatpush1.msra.mxu0 0.0
        %724 = vmatprep.subr.mxu0 0.0
        %725 = vmatpush1.msra.mxu0 0.0
        %726 = vmatprep.subr.mxu0 0.0
        %727 = vmatpush1.msra.mxu0 0.0
        %728 = vmatprep.subr.mxu0 0.0
        %729 = vmatpush1.msra.mxu0 0.0
        %730 = vmatprep.subr.mxu0 0.0
        %731 = vmatpush1.msra.mxu0 0.0
        %732 = vmatprep.subr.mxu0 0.0
        %733 = vmatpush1.msra.mxu0 0.0
        %734 = vmatprep.subr.mxu0 0.0
        %735 = vmatpush1.msra.mxu0 0.0
        %736 = vmatprep.subr.mxu0 0.0
        %737 = vmatpush1.msra.mxu0 0.0
        %738 = vmatprep.subr.mxu0 0.0
        %739 = vmatpush1.msra.mxu0 0.0
        %740 = vmatprep.subr.mxu0 0.0
        %741 = vmatpush1.msra.mxu0 0.0
        %742 = vmatprep.subr.mxu0 0.0
        %743 = vmatpush1.msra.mxu0 0.0
        %744 = vmatprep.subr.mxu0 0.0
        %745 = vmatpush1.msra.mxu0 0.0
        %746 = vmatprep.subr.mxu0 0.0
        %747 = vmatpush1.msra.mxu0 0.0
        %748 = vmatprep.mubr.f32.mxu0 0.0
        %749 = vmatmul.mubr.f32.gmra.mrb[0].mxu0 %v301
        %v750 = vpop.f32.mrb[0].mxu0
        %v751 = vadd.f32 0.0, %v750
        %v752 = vpop.f32.mrb[0].mxu0
        %753 = vdwg.mxu0
        %s754 = scalar_lea.vmem %s286, 8 [#allocation6]
        %755 = vst.msk [vmem:[%s754] sm:$0xff] %vm373, %v751
        %s756 = scalar_lea.vmem %s1, 64
        %v757 = vld [vmem:[%s756] sm:$0xff]
        %v758 = vld [vmem:[%s756 + $0x8] sm:$0xff]
        %v759 = vld [vmem:[%s756 + $0x10] sm:$0xff]
        %v760 = vld [vmem:[%s756 + $0x18] sm:$0xff]
        %761 = vmatprep.subr.mxu0 0.0
        %762 = vmatpush1.msra.mxu0 %v757
        %763 = vmatprep.subr.mxu0 0.0
        %764 = vmatpush1.msra.mxu0 %v758
        %765 = vmatprep.subr.mxu0 0.0
        %766 = vmatpush1.msra.mxu0 %v759
        %767 = vmatprep.subr.mxu0 0.0
        %768 = vmatpush1.msra.mxu0 %v760
        %769 = vmatprep.subr.mxu0 0.0
        %770 = vmatpush1.msra.mxu0 0.0
        %771 = vmatprep.subr.mxu0 0.0
        %772 = vmatpush1.msra.mxu0 0.0
        %773 = vmatprep.subr.mxu0 0.0
        %774 = vmatpush1.msra.mxu0 0.0
        %775 = vmatprep.subr.mxu0 0.0
        %776 = vmatpush1.msra.mxu0 0.0
        %777 = vmatprep.subr.mxu0 0.0
        %778 = vmatpush1.msra.mxu0 0.0
        %779 = vmatprep.subr.mxu0 0.0
        %780 = vmatpush1.msra.mxu0 0.0
        %781 = vmatprep.subr.mxu0 0.0
        %782 = vmatpush1.msra.mxu0 0.0
        %783 = vmatprep.subr.mxu0 0.0
        %784 = vmatpush1.msra.mxu0 0.0
        %785 = vmatprep.subr.mxu0 0.0
        %786 = vmatpush1.msra.mxu0 0.0
        %787 = vmatprep.subr.mxu0 0.0
        %788 = vmatpush1.msra.mxu0 0.0
        %789 = vmatprep.subr.mxu0 0.0
        %790 = vmatpush1.msra.mxu0 0.0
        %791 = vmatprep.subr.mxu0 0.0
        %792 = vmatpush1.msra.mxu0 0.0
        %793 = vmatprep.subr.mxu0 0.0
        %794 = vmatpush1.msra.mxu0 0.0
        %795 = vmatprep.subr.mxu0 0.0
        %796 = vmatpush1.msra.mxu0 0.0
        %797 = vmatprep.subr.mxu0 0.0
        %798 = vmatpush1.msra.mxu0 0.0
        %799 = vmatprep.subr.mxu0 0.0
        %800 = vmatpush1.msra.mxu0 0.0
        %801 = vmatprep.subr.mxu0 0.0
        %802 = vmatpush1.msra.mxu0 0.0
        %803 = vmatprep.subr.mxu0 0.0
        %804 = vmatpush1.msra.mxu0 0.0
        %805 = vmatprep.subr.mxu0 0.0
        %806 = vmatpush1.msra.mxu0 0.0
        %807 = vmatprep.subr.mxu0 0.0
        %808 = vmatpush1.msra.mxu0 0.0
        %809 = vmatprep.subr.mxu0 0.0
        %810 = vmatpush1.msra.mxu0 0.0
        %811 = vmatprep.subr.mxu0 0.0
        %812 = vmatpush1.msra.mxu0 0.0
        %813 = vmatprep.subr.mxu0 0.0
        %814 = vmatpush1.msra.mxu0 0.0
        %815 = vmatprep.subr.mxu0 0.0
        %816 = vmatpush1.msra.mxu0 0.0
        %817 = vmatprep.subr.mxu0 0.0
        %818 = vmatpush1.msra.mxu0 0.0
        %819 = vmatprep.subr.mxu0 0.0
        %820 = vmatpush1.msra.mxu0 0.0
        %821 = vmatprep.subr.mxu0 0.0
        %822 = vmatpush1.msra.mxu0 0.0
        %823 = vmatprep.subr.mxu0 0.0
        %824 = vmatpush1.msra.mxu0 0.0
        %825 = vmatprep.mubr.f32.mxu0 0.0
        %826 = vmatmul.mubr.f32.gmra.mrb[0].mxu0 %v301
        %v827 = vpop.f32.mrb[0].mxu0
        %v828 = vadd.f32 0.0, %v827
        %v829 = vpop.f32.mrb[0].mxu0
        %830 = vdwg.mxu0
        %s831 = scalar_lea.vmem %s272, 16 [#allocation2]
        %832 = vst.msk [vmem:[%s831] sm:$0xff] %vm373, %v828
        %s833 = scalar_lea.vmem %s2, 64
        %v834 = vld [vmem:[%s833] sm:$0xff]
        %v835 = vld [vmem:[%s833 + $0x8] sm:$0xff]
        %v836 = vld [vmem:[%s833 + $0x10] sm:$0xff]
        %v837 = vld [vmem:[%s833 + $0x18] sm:$0xff]
        %838 = vmatprep.subr.mxu0 0.0
        %839 = vmatpush1.msra.mxu0 %v834
        %840 = vmatprep.subr.mxu0 0.0
        %841 = vmatpush1.msra.mxu0 %v835
        %842 = vmatprep.subr.mxu0 0.0
        %843 = vmatpush1.msra.mxu0 %v836
        %844 = vmatprep.subr.mxu0 0.0
        %845 = vmatpush1.msra.mxu0 %v837
        %846 = vmatprep.subr.mxu0 0.0
        %847 = vmatpush1.msra.mxu0 0.0
        %848 = vmatprep.subr.mxu0 0.0
        %849 = vmatpush1.msra.mxu0 0.0
        %850 = vmatprep.subr.mxu0 0.0
        %851 = vmatpush1.msra.mxu0 0.0
        %852 = vmatprep.subr.mxu0 0.0
        %853 = vmatpush1.msra.mxu0 0.0
        %854 = vmatprep.subr.mxu0 0.0
        %855 = vmatpush1.msra.mxu0 0.0
        %856 = vmatprep.subr.mxu0 0.0
        %857 = vmatpush1.msra.mxu0 0.0
        %858 = vmatprep.subr.mxu0 0.0
        %859 = vmatpush1.msra.mxu0 0.0
        %860 = vmatprep.subr.mxu0 0.0
        %861 = vmatpush1.msra.mxu0 0.0
        %862 = vmatprep.subr.mxu0 0.0
        %863 = vmatpush1.msra.mxu0 0.0
        %864 = vmatprep.subr.mxu0 0.0
        %865 = vmatpush1.msra.mxu0 0.0
        %866 = vmatprep.subr.mxu0 0.0
        %867 = vmatpush1.msra.mxu0 0.0
        %868 = vmatprep.subr.mxu0 0.0
        %869 = vmatpush1.msra.mxu0 0.0
        %870 = vmatprep.subr.mxu0 0.0
        %871 = vmatpush1.msra.mxu0 0.0
        %872 = vmatprep.subr.mxu0 0.0
        %873 = vmatpush1.msra.mxu0 0.0
        %874 = vmatprep.subr.mxu0 0.0
        %875 = vmatpush1.msra.mxu0 0.0
        %876 = vmatprep.subr.mxu0 0.0
        %877 = vmatpush1.msra.mxu0 0.0
        %878 = vmatprep.subr.mxu0 0.0
        %879 = vmatpush1.msra.mxu0 0.0
        %880 = vmatprep.subr.mxu0 0.0
        %881 = vmatpush1.msra.mxu0 0.0
        %882 = vmatprep.subr.mxu0 0.0
        %883 = vmatpush1.msra.mxu0 0.0
        %884 = vmatprep.subr.mxu0 0.0
        %885 = vmatpush1.msra.mxu0 0.0
        %886 = vmatprep.subr.mxu0 0.0
        %887 = vmatpush1.msra.mxu0 0.0
        %888 = vmatprep.subr.mxu0 0.0
        %889 = vmatpush1.msra.mxu0 0.0
        %890 = vmatprep.subr.mxu0 0.0
        %891 = vmatpush1.msra.mxu0 0.0
        %892 = vmatprep.subr.mxu0 0.0
        %893 = vmatpush1.msra.mxu0 0.0
        %894 = vmatprep.subr.mxu0 0.0
        %895 = vmatpush1.msra.mxu0 0.0
        %896 = vmatprep.subr.mxu0 0.0
        %897 = vmatpush1.msra.mxu0 0.0
        %898 = vmatprep.subr.mxu0 0.0
        %899 = vmatpush1.msra.mxu0 0.0
        %900 = vmatprep.subr.mxu0 0.0
        %901 = vmatpush1.msra.mxu0 0.0
        %902 = vmatprep.mubr.f32.mxu0 0.0
        %903 = vmatmul.mubr.f32.gmra.mrb[0].mxu0 %v301
        %v904 = vpop.f32.mrb[0].mxu0
        %v905 = vadd.f32 0.0, %v904
        %v906 = vpop.f32.mrb[0].mxu0
        %907 = vdwg.mxu0
        %s908 = scalar_lea.vmem %s279, 16 [#allocation4]
        %909 = vst.msk [vmem:[%s908] sm:$0xff] %vm373, %v905
        %s910 = scalar_lea.vmem %s3, 64
        %v911 = vld [vmem:[%s910] sm:$0xff]
        %v912 = vld [vmem:[%s910 + $0x8] sm:$0xff]
        %v913 = vld [vmem:[%s910 + $0x10] sm:$0xff]
        %v914 = vld [vmem:[%s910 + $0x18] sm:$0xff]
        %915 = vmatprep.subr.mxu0 0.0
        %916 = vmatpush1.msra.mxu0 %v911
        %917 = vmatprep.subr.mxu0 0.0
        %918 = vmatpush1.msra.mxu0 %v912
        %919 = vmatprep.subr.mxu0 0.0
        %920 = vmatpush1.msra.mxu0 %v913
        %921 = vmatprep.subr.mxu0 0.0
        %922 = vmatpush1.msra.mxu0 %v914
        %923 = vmatprep.subr.mxu0 0.0
        %924 = vmatpush1.msra.mxu0 0.0
        %925 = vmatprep.subr.mxu0 0.0
        %926 = vmatpush1.msra.mxu0 0.0
        %927 = vmatprep.subr.mxu0 0.0
        %928 = vmatpush1.msra.mxu0 0.0
        %929 = vmatprep.subr.mxu0 0.0
        %930 = vmatpush1.msra.mxu0 0.0
        %931 = vmatprep.subr.mxu0 0.0
        %932 = vmatpush1.msra.mxu0 0.0
        %933 = vmatprep.subr.mxu0 0.0
        %934 = vmatpush1.msra.mxu0 0.0
        %935 = vmatprep.subr.mxu0 0.0
        %936 = vmatpush1.msra.mxu0 0.0
        %937 = vmatprep.subr.mxu0 0.0
        %938 = vmatpush1.msra.mxu0 0.0
        %939 = vmatprep.subr.mxu0 0.0
        %940 = vmatpush1.msra.mxu0 0.0
        %941 = vmatprep.subr.mxu0 0.0
        %942 = vmatpush1.msra.mxu0 0.0
        %943 = vmatprep.subr.mxu0 0.0
        %944 = vmatpush1.msra.mxu0 0.0
        %945 = vmatprep.subr.mxu0 0.0
        %946 = vmatpush1.msra.mxu0 0.0
        %947 = vmatprep.subr.mxu0 0.0
        %948 = vmatpush1.msra.mxu0 0.0
        %949 = vmatprep.subr.mxu0 0.0
        %950 = vmatpush1.msra.mxu0 0.0
        %951 = vmatprep.subr.mxu0 0.0
        %952 = vmatpush1.msra.mxu0 0.0
        %953 = vmatprep.subr.mxu0 0.0
        %954 = vmatpush1.msra.mxu0 0.0
        %955 = vmatprep.subr.mxu0 0.0
        %956 = vmatpush1.msra.mxu0 0.0
        %957 = vmatprep.subr.mxu0 0.0
        %958 = vmatpush1.msra.mxu0 0.0
        %959 = vmatprep.subr.mxu0 0.0
        %960 = vmatpush1.msra.mxu0 0.0
        %961 = vmatprep.subr.mxu0 0.0
        %962 = vmatpush1.msra.mxu0 0.0
        %963 = vmatprep.subr.mxu0 0.0
        %964 = vmatpush1.msra.mxu0 0.0
        %965 = vmatprep.subr.mxu0 0.0
        %966 = vmatpush1.msra.mxu0 0.0
        %967 = vmatprep.subr.mxu0 0.0
        %968 = vmatpush1.msra.mxu0 0.0
        %969 = vmatprep.subr.mxu0 0.0
        %970 = vmatpush1.msra.mxu0 0.0
        %971 = vmatprep.subr.mxu0 0.0
        %972 = vmatpush1.msra.mxu0 0.0
        %973 = vmatprep.subr.mxu0 0.0
        %974 = vmatpush1.msra.mxu0 0.0
        %975 = vmatprep.subr.mxu0 0.0
        %976 = vmatpush1.msra.mxu0 0.0
        %977 = vmatprep.subr.mxu0 0.0
        %978 = vmatpush1.msra.mxu0 0.0
        %979 = vmatprep.mubr.f32.mxu0 0.0
        %980 = vmatmul.mubr.f32.gmra.mrb[0].mxu0 %v301
        %v981 = vpop.f32.mrb[0].mxu0
        %v982 = vadd.f32 0.0, %v981
        %v983 = vpop.f32.mrb[0].mxu0
        %984 = vdwg.mxu0
        %s985 = scalar_lea.vmem %s286, 16 [#allocation6]
        %986 = vst.msk [vmem:[%s985] sm:$0xff] %vm373, %v982
        %s987 = scalar_lea.vmem %s1, 96
        %v988 = vld [vmem:[%s987] sm:$0xff]
        %v989 = vld [vmem:[%s987 + $0x8] sm:$0xff]
        %v990 = vld [vmem:[%s987 + $0x10] sm:$0xff]
        %v991 = vld [vmem:[%s987 + $0x18] sm:$0xff]
        %992 = vmatprep.subr.mxu0 0.0
        %993 = vmatpush1.msra.mxu0 %v988
        %994 = vmatprep.subr.mxu0 0.0
        %995 = vmatpush1.msra.mxu0 %v989
        %996 = vmatprep.subr.mxu0 0.0
        %997 = vmatpush1.msra.mxu0 %v990
        %998 = vmatprep.subr.mxu0 0.0
        %999 = vmatpush1.msra.mxu0 %v991
        %1000 = vmatprep.subr.mxu0 0.0
        %1001 = vmatpush1.msra.mxu0 0.0
        %1002 = vmatprep.subr.mxu0 0.0
        %1003 = vmatpush1.msra.mxu0 0.0
        %1004 = vmatprep.subr.mxu0 0.0
        %1005 = vmatpush1.msra.mxu0 0.0
        %1006 = vmatprep.subr.mxu0 0.0
        %1007 = vmatpush1.msra.mxu0 0.0
        %1008 = vmatprep.subr.mxu0 0.0
        %1009 = vmatpush1.msra.mxu0 0.0
        %1010 = vmatprep.subr.mxu0 0.0
        %1011 = vmatpush1.msra.mxu0 0.0
        %1012 = vmatprep.subr.mxu0 0.0
        %1013 = vmatpush1.msra.mxu0 0.0
        %1014 = vmatprep.subr.mxu0 0.0
        %1015 = vmatpush1.msra.mxu0 0.0
        %1016 = vmatprep.subr.mxu0 0.0
        %1017 = vmatpush1.msra.mxu0 0.0
        %1018 = vmatprep.subr.mxu0 0.0
        %1019 = vmatpush1.msra.mxu0 0.0
        %1020 = vmatprep.subr.mxu0 0.0
        %1021 = vmatpush1.msra.mxu0 0.0
        %1022 = vmatprep.subr.mxu0 0.0
        %1023 = vmatpush1.msra.mxu0 0.0
        %1024 = vmatprep.subr.mxu0 0.0
        %1025 = vmatpush1.msra.mxu0 0.0
        %1026 = vmatprep.subr.mxu0 0.0
        %1027 = vmatpush1.msra.mxu0 0.0
        %1028 = vmatprep.subr.mxu0 0.0
        %1029 = vmatpush1.msra.mxu0 0.0
        %1030 = vmatprep.subr.mxu0 0.0
        %1031 = vmatpush1.msra.mxu0 0.0
        %1032 = vmatprep.subr.mxu0 0.0
        %1033 = vmatpush1.msra.mxu0 0.0
        %1034 = vmatprep.subr.mxu0 0.0
        %1035 = vmatpush1.msra.mxu0 0.0
        %1036 = vmatprep.subr.mxu0 0.0
        %1037 = vmatpush1.msra.mxu0 0.0
        %1038 = vmatprep.subr.mxu0 0.0
        %1039 = vmatpush1.msra.mxu0 0.0
        %1040 = vmatprep.subr.mxu0 0.0
        %1041 = vmatpush1.msra.mxu0 0.0
        %1042 = vmatprep.subr.mxu0 0.0
        %1043 = vmatpush1.msra.mxu0 0.0
        %1044 = vmatprep.subr.mxu0 0.0
        %1045 = vmatpush1.msra.mxu0 0.0
        %1046 = vmatprep.subr.mxu0 0.0
        %1047 = vmatpush1.msra.mxu0 0.0
        %1048 = vmatprep.subr.mxu0 0.0
        %1049 = vmatpush1.msra.mxu0 0.0
        %1050 = vmatprep.subr.mxu0 0.0
        %1051 = vmatpush1.msra.mxu0 0.0
        %1052 = vmatprep.subr.mxu0 0.0
        %1053 = vmatpush1.msra.mxu0 0.0
        %1054 = vmatprep.subr.mxu0 0.0
        %1055 = vmatpush1.msra.mxu0 0.0
        %1056 = vmatprep.mubr.f32.mxu0 0.0
        %1057 = vmatmul.mubr.f32.gmra.mrb[0].mxu0 %v301
        %v1058 = vpop.f32.mrb[0].mxu0
        %v1059 = vadd.f32 0.0, %v1058
        %v1060 = vpop.f32.mrb[0].mxu0
        %1061 = vdwg.mxu0
        %s1062 = scalar_lea.vmem %s272, 24 [#allocation2]
        %1063 = vst.msk [vmem:[%s1062] sm:$0xff] %vm373, %v1059
        %s1064 = scalar_lea.vmem %s2, 96
        %v1065 = vld [vmem:[%s1064] sm:$0xff]
        %v1066 = vld [vmem:[%s1064 + $0x8] sm:$0xff]
        %v1067 = vld [vmem:[%s1064 + $0x10] sm:$0xff]
        %v1068 = vld [vmem:[%s1064 + $0x18] sm:$0xff]
        %1069 = vmatprep.subr.mxu0 0.0
        %1070 = vmatpush1.msra.mxu0 %v1065
        %1071 = vmatprep.subr.mxu0 0.0
        %1072 = vmatpush1.msra.mxu0 %v1066
        %1073 = vmatprep.subr.mxu0 0.0
        %1074 = vmatpush1.msra.mxu0 %v1067
        %1075 = vmatprep.subr.mxu0 0.0
        %1076 = vmatpush1.msra.mxu0 %v1068
        %1077 = vmatprep.subr.mxu0 0.0
        %1078 = vmatpush1.msra.mxu0 0.0
        %1079 = vmatprep.subr.mxu0 0.0
        %1080 = vmatpush1.msra.mxu0 0.0
        %1081 = vmatprep.subr.mxu0 0.0
        %1082 = vmatpush1.msra.mxu0 0.0
        %1083 = vmatprep.subr.mxu0 0.0
        %1084 = vmatpush1.msra.mxu0 0.0
        %1085 = vmatprep.subr.mxu0 0.0
        %1086 = vmatpush1.msra.mxu0 0.0
        %1087 = vmatprep.subr.mxu0 0.0
        %1088 = vmatpush1.msra.mxu0 0.0
        %1089 = vmatprep.subr.mxu0 0.0
        %1090 = vmatpush1.msra.mxu0 0.0
        %1091 = vmatprep.subr.mxu0 0.0
        %1092 = vmatpush1.msra.mxu0 0.0
        %1093 = vmatprep.subr.mxu0 0.0
        %1094 = vmatpush1.msra.mxu0 0.0
        %1095 = vmatprep.subr.mxu0 0.0
        %1096 = vmatpush1.msra.mxu0 0.0
        %1097 = vmatprep.subr.mxu0 0.0
        %1098 = vmatpush1.msra.mxu0 0.0
        %1099 = vmatprep.subr.mxu0 0.0
        %1100 = vmatpush1.msra.mxu0 0.0
        %1101 = vmatprep.subr.mxu0 0.0
        %1102 = vmatpush1.msra.mxu0 0.0
        %1103 = vmatprep.subr.mxu0 0.0
        %1104 = vmatpush1.msra.mxu0 0.0
        %1105 = vmatprep.subr.mxu0 0.0
        %1106 = vmatpush1.msra.mxu0 0.0
        %1107 = vmatprep.subr.mxu0 0.0
        %1108 = vmatpush1.msra.mxu0 0.0
        %1109 = vmatprep.subr.mxu0 0.0
        %1110 = vmatpush1.msra.mxu0 0.0
        %1111 = vmatprep.subr.mxu0 0.0
        %1112 = vmatpush1.msra.mxu0 0.0
        %1113 = vmatprep.subr.mxu0 0.0
        %1114 = vmatpush1.msra.mxu0 0.0
        %1115 = vmatprep.subr.mxu0 0.0
        %1116 = vmatpush1.msra.mxu0 0.0
        %1117 = vmatprep.subr.mxu0 0.0
        %1118 = vmatpush1.msra.mxu0 0.0
        %1119 = vmatprep.subr.mxu0 0.0
        %1120 = vmatpush1.msra.mxu0 0.0
        %1121 = vmatprep.subr.mxu0 0.0
        %1122 = vmatpush1.msra.mxu0 0.0
        %1123 = vmatprep.subr.mxu0 0.0
        %1124 = vmatpush1.msra.mxu0 0.0
        %1125 = vmatprep.subr.mxu0 0.0
        %1126 = vmatpush1.msra.mxu0 0.0
        %1127 = vmatprep.subr.mxu0 0.0
        %1128 = vmatpush1.msra.mxu0 0.0
        %1129 = vmatprep.subr.mxu0 0.0
        %1130 = vmatpush1.msra.mxu0 0.0
        %1131 = vmatprep.subr.mxu0 0.0
        %1132 = vmatpush1.msra.mxu0 0.0
        %1133 = vmatprep.mubr.f32.mxu0 0.0
        %1134 = vmatmul.mubr.f32.gmra.mrb[0].mxu0 %v301
        %v1135 = vpop.f32.mrb[0].mxu0
        %v1136 = vadd.f32 0.0, %v1135
        %v1137 = vpop.f32.mrb[0].mxu0
        %1138 = vdwg.mxu0
        %s1139 = scalar_lea.vmem %s279, 24 [#allocation4]
        %1140 = vst.msk [vmem:[%s1139] sm:$0xff] %vm373, %v1136
        %s1141 = scalar_lea.vmem %s3, 96
        %v1142 = vld [vmem:[%s1141] sm:$0xff]
        %v1143 = vld [vmem:[%s1141 + $0x8] sm:$0xff]
        %v1144 = vld [vmem:[%s1141 + $0x10] sm:$0xff]
        %v1145 = vld [vmem:[%s1141 + $0x18] sm:$0xff]
        %1146 = vmatprep.subr.mxu0 0.0
        %1147 = vmatpush1.msra.mxu0 %v1142
        %1148 = vmatprep.subr.mxu0 0.0
        %1149 = vmatpush1.msra.mxu0 %v1143
        %1150 = vmatprep.subr.mxu0 0.0
        %1151 = vmatpush1.msra.mxu0 %v1144
        %1152 = vmatprep.subr.mxu0 0.0
        %1153 = vmatpush1.msra.mxu0 %v1145
        %1154 = vmatprep.subr.mxu0 0.0
        %1155 = vmatpush1.msra.mxu0 0.0
        %1156 = vmatprep.subr.mxu0 0.0
        %1157 = vmatpush1.msra.mxu0 0.0
        %1158 = vmatprep.subr.mxu0 0.0
        %1159 = vmatpush1.msra.mxu0 0.0
        %1160 = vmatprep.subr.mxu0 0.0
        %1161 = vmatpush1.msra.mxu0 0.0
        %1162 = vmatprep.subr.mxu0 0.0
        %1163 = vmatpush1.msra.mxu0 0.0
        %1164 = vmatprep.subr.mxu0 0.0
        %1165 = vmatpush1.msra.mxu0 0.0
        %1166 = vmatprep.subr.mxu0 0.0
        %1167 = vmatpush1.msra.mxu0 0.0
        %1168 = vmatprep.subr.mxu0 0.0
        %1169 = vmatpush1.msra.mxu0 0.0
        %1170 = vmatprep.subr.mxu0 0.0
        %1171 = vmatpush1.msra.mxu0 0.0
        %1172 = vmatprep.subr.mxu0 0.0
        %1173 = vmatpush1.msra.mxu0 0.0
        %1174 = vmatprep.subr.mxu0 0.0
        %1175 = vmatpush1.msra.mxu0 0.0
        %1176 = vmatprep.subr.mxu0 0.0
        %1177 = vmatpush1.msra.mxu0 0.0
        %1178 = vmatprep.subr.mxu0 0.0
        %1179 = vmatpush1.msra.mxu0 0.0
        %1180 = vmatprep.subr.mxu0 0.0
        %1181 = vmatpush1.msra.mxu0 0.0
        %1182 = vmatprep.subr.mxu0 0.0
        %1183 = vmatpush1.msra.mxu0 0.0
        %1184 = vmatprep.subr.mxu0 0.0
        %1185 = vmatpush1.msra.mxu0 0.0
        %1186 = vmatprep.subr.mxu0 0.0
        %1187 = vmatpush1.msra.mxu0 0.0
        %1188 = vmatprep.subr.mxu0 0.0
        %1189 = vmatpush1.msra.mxu0 0.0
        %1190 = vmatprep.subr.mxu0 0.0
        %1191 = vmatpush1.msra.mxu0 0.0
        %1192 = vmatprep.subr.mxu0 0.0
        %1193 = vmatpush1.msra.mxu0 0.0
        %1194 = vmatprep.subr.mxu0 0.0
        %1195 = vmatpush1.msra.mxu0 0.0
        %1196 = vmatprep.subr.mxu0 0.0
        %1197 = vmatpush1.msra.mxu0 0.0
        %1198 = vmatprep.subr.mxu0 0.0
        %1199 = vmatpush1.msra.mxu0 0.0
        %1200 = vmatprep.subr.mxu0 0.0
        %1201 = vmatpush1.msra.mxu0 0.0
        %1202 = vmatprep.subr.mxu0 0.0
        %1203 = vmatpush1.msra.mxu0 0.0
        %1204 = vmatprep.subr.mxu0 0.0
        %1205 = vmatpush1.msra.mxu0 0.0
        %1206 = vmatprep.subr.mxu0 0.0
        %1207 = vmatpush1.msra.mxu0 0.0
        %1208 = vmatprep.subr.mxu0 0.0
        %1209 = vmatpush1.msra.mxu0 0.0
        %1210 = vmatprep.mubr.f32.mxu0 0.0
        %1211 = vmatmul.mubr.f32.gmra.mrb[0].mxu0 %v301
        %v1212 = vpop.f32.mrb[0].mxu0
        %v1213 = vadd.f32 0.0, %v1212
        %v1214 = vpop.f32.mrb[0].mxu0
        %1215 = vdwg.mxu0
        %s1216 = scalar_lea.vmem %s286, 24 [#allocation6]
        %1217 = vst.msk [vmem:[%s1216] sm:$0xff] %vm373, %v1213
        %s1218 = sand.u32 %s137, 1
        %s1219 = scalar_lea.sflag [#allocation3], %s1218
        %s1220 = sand.u32 %s137, 1
        %s1221 = smul.addr %s1220, 32
        %s1222 = scalar_lea.vmem [#allocation2], %s1221
        %s1223 = sand.u32 %s24, 1
        %s1224 = scalar_lea.sflag [#allocation5], %s1223
        %s1225 = sand.u32 %s165, 1
        %s1226 = smul.addr %s1225, 32
        %s1227 = scalar_lea.vmem [#allocation4], %s1226
        %s1228 = sand.u32 %s24, 1
        %s1229 = scalar_lea.sflag [#allocation5], %s1228
        %s1230 = sand.u32 %s193, 1
        %s1231 = smul.addr %s1230, 32
        %s1232 = scalar_lea.vmem [#allocation6], %s1231
        // Predicated region
        $region37: #{tpu_custom_call.1} parent=35 // pred_check
          %p1233 = pneg %p147
        $region38: #{tpu_custom_call.1} parent=35 // pred_check_branch
          %1235 = sbr.rel (%p1233) target = $region40
        $region39: #{tpu_custom_call.1} parent=35 // pred_region
          %s1237 = ssub.s32 512, 512
          %1238 = vsyncadd %s1219, %s1237
          %s1239 = smul.addr %s28, 4
          %s1240 = sadd.s32 %s29, %s1239
          %s1241 = smul.addr %s1240, 128
          %s1242 = scalar_lea.hbm %s4, %s1241
          %s1243 = sshll.u32 %s1222, 4
          %s1244 = int_to_ptr.vmem [resolvable:$true] %s1243
          %1249 = dma.vmem_to_hbm [thread:$0]  %s1244, 512, %s1242, %s1219, 128, 128, 8
        $region40: #{tpu_custom_call.1} parent=35 // pred_fallthru
          _
        // Predicated region
        $region41: #{tpu_custom_call.1} parent=35 // pred_check
          %p1250 = pneg %p175
        $region42: #{tpu_custom_call.1} parent=35 // pred_check_branch
          %1252 = sbr.rel (%p1250) target = $region44
        $region43: #{tpu_custom_call.1} parent=35 // pred_region
          %s1254 = ssub.s32 512, 512
          %1255 = vsyncadd %s1224, %s1254
          %s1256 = smul.addr %s28, 4
          %s1257 = sadd.s32 %s29, %s1256
          %s1258 = smul.addr %s1257, 128
          %s1259 = scalar_lea.hbm %s5, %s1258
          %s1260 = sshll.u32 %s1227, 4
          %s1261 = int_to_ptr.vmem [resolvable:$true] %s1260
          %1266 = dma.vmem_to_hbm [thread:$0]  %s1261, 512, %s1259, %s1224, 128, 128, 8
        $region44: #{tpu_custom_call.1} parent=35 // pred_fallthru
          _
        // Predicated region
        $region45: #{tpu_custom_call.1} parent=35 // pred_check
          %p1267 = pneg %p203
        $region46: #{tpu_custom_call.1} parent=35 // pred_check_branch
          %1269 = sbr.rel (%p1267) target = $region48
        $region47: #{tpu_custom_call.1} parent=35 // pred_region
          %s1271 = ssub.s32 512, 512
          %1272 = vsyncadd %s1229, %s1271
          %s1273 = smul.addr %s28, 4
          %s1274 = sadd.s32 %s29, %s1273
          %s1275 = smul.addr %s1274, 128
          %s1276 = scalar_lea.hbm %s6, %s1275
          %s1277 = sshll.u32 %s1232, 4
          %s1278 = int_to_ptr.vmem [resolvable:$true] %s1277
          %1283 = dma.vmem_to_hbm [thread:$0]  %s1278, 512, %s1276, %s1229, 128, 128, 8
        $region48: #{tpu_custom_call.1} parent=35 // pred_fallthru
          _
      $region36: #{tpu_custom_call.1} parent=5 // pred_fallthru
        _
      %p1284 = scmp.le.s32.totalorder 2, %s19
      // Predicated region
      $region49: #{tpu_custom_call.1} parent=5 // pred_check
        %p1285 = pneg %p1284
      $region50: #{tpu_custom_call.1} parent=5 // pred_check_branch
        %1287 = sbr.rel (%p1285) target = $region52
      $region51: #{tpu_custom_call.1} parent=5 // pred_region
        %s1288 = ssub.s32 %s19, 2
        // Predicated region
        $region53: #{tpu_custom_call.1} parent=51 // pred_check
          %p1289 = pneg %p153
        $region54: #{tpu_custom_call.1} parent=51 // pred_check_branch
          %1291 = sbr.rel (%p1289) target = $region56
        $region55: #{tpu_custom_call.1} parent=51 // pred_region
          %s1292 = sand.u32 %s138, 1
          %s1293 = scalar_lea.sflag [#allocation3], %s1292
          %s1294 = sand.u32 %s138, 1
          %s1295 = smul.addr %s1294, 32
          %s1296 = scalar_lea.vmem [#allocation2], %s1295
          %1297 = dma.done %s1293, 512
        $region56: #{tpu_custom_call.1} parent=51 // pred_fallthru
          _
        // Predicated region
        $region57: #{tpu_custom_call.1} parent=51 // pred_check
          %p1298 = pneg %p181
        $region58: #{tpu_custom_call.1} parent=51 // pred_check_branch
          %1300 = sbr.rel (%p1298) target = $region60
        $region59: #{tpu_custom_call.1} parent=51 // pred_region
          %s1301 = sand.u32 %s25, 1
          %s1302 = scalar_lea.sflag [#allocation5], %s1301
          %s1303 = sand.u32 %s166, 1
          %s1304 = smul.addr %s1303, 32
          %s1305 = scalar_lea.vmem [#allocation4], %s1304
          %1306 = dma.done %s1302, 512
        $region60: #{tpu_custom_call.1} parent=51 // pred_fallthru
          _
        // Predicated region
        $region61: #{tpu_custom_call.1} parent=51 // pred_check
          %p1307 = pneg %p209
        $region62: #{tpu_custom_call.1} parent=51 // pred_check_branch
          %1309 = sbr.rel (%p1307) target = $region64
        $region63: #{tpu_custom_call.1} parent=51 // pred_region
          %s1310 = sand.u32 %s25, 1
          %s1311 = scalar_lea.sflag [#allocation5], %s1310
          %s1312 = sand.u32 %s194, 1
          %s1313 = smul.addr %s1312, 32
          %s1314 = scalar_lea.vmem [#allocation6], %s1313
          %1315 = dma.done %s1311, 512
        $region64: #{tpu_custom_call.1} parent=51 // pred_fallthru
          _
      $region52: #{tpu_custom_call.1} parent=5 // pred_fallthru
        _
    $region6: #{tpu_custom_call.1} parent=1 // loop_footer
      %s23 = sadd.s32 1, %s19
    $region7: #{tpu_custom_call.1} parent=1 // loop_footer_branch
      %18 = sbr.rel target = $region3
    $region8: #{tpu_custom_call.1} parent=1 // loop_exit
      _
    %1316 = vsyncpa [#allocation3], 1
    %s1317 = scalar_lea.sflag [#allocation3], 1
    %1318 = vsyncpa %s1317, 1
    %1319 = vsyncpa [#allocation5], 1
    %s1320 = scalar_lea.sflag [#allocation5], 1
    %1321 = vsyncpa %s1320, 1

</llo_original>
